<compile_context>
chip_gen: v6e
topology: v6e:2x2x1
jax: 0.10.0
libtpu: 0.0.40
codegen_flags: <defaults>
</compile_context>

<pallas_src>
import functools

import numpy as np
import jax
import jax.numpy as jnp
from jax import lax
from jax.experimental import pallas as pl
from jax.experimental.pallas import tpu as pltpu


def _round_up(x, m):
    return (x + m - 1) // m * m


def _gru_kernel(x_ref, wih_ref, whh_ref, bi_ref, bhn_ref, full_ref,
                h_ref, gi_ref, *, t_blk, b_blk, h_pad, s_total):
    """One grid step == t_blk timesteps of one batch block.

    grid = (batch_block [parallel], time_block [arbitrary/serial]).
    The fp32 hidden state of this batch block is carried across time blocks in VMEM."""
    tb = pl.program_id(1)

    @pl.when(tb == 0)
    def _():
        h_ref[...] = jnp.zeros_like(h_ref)

    # ---- time-parallel input projection for the whole block: one big MXU matmul ----
    # (t_blk*b_blk, I) @ (I, 3*h_pad), fp32 accumulation, folded (b_i + b_h) r/z biases.
    i_size = x_ref.shape[-1]
    xb = x_ref[...].reshape(t_blk * b_blk, i_size)
    gi = jnp.dot(xb, wih_ref[...], preferred_element_type=jnp.float32) + bi_ref[...]
    gi_ref[...] = gi.reshape(t_blk, b_blk, 3 * h_pad)

    # Hoisted out of the recurrence: one broadcast instead of t_blk.
    bhn_b = jnp.broadcast_to(bhn_ref[...], (b_blk, h_pad)).astype(jnp.float32)

    def step(i, h):
        gi_i = gi_ref[i]                                    # (b_blk, 3Hp) fp32
        gh = jnp.dot(h.astype(whh_ref.dtype), whh_ref[...],
                     preferred_element_type=jnp.float32)    # (b_blk, 3Hp) fp32

        # Gate slices are h_pad (=128k)-aligned -> whole-vreg lane groups, no shuffles.
        i_r = gi_i[:, 0 * h_pad:1 * h_pad]
        i_z = gi_i[:, 1 * h_pad:2 * h_pad]
        i_n = gi_i[:, 2 * h_pad:3 * h_pad]
        h_r = gh[:, 0 * h_pad:1 * h_pad]
        h_z = gh[:, 1 * h_pad:2 * h_pad]
        h_n = gh[:, 2 * h_pad:3 * h_pad]

        r = jax.nn.sigmoid(i_r + h_r)        # (b_ir + b_hr) already folded into gi
        z = jax.nn.sigmoid(i_z + h_z)        # (b_iz + b_hz) already folded into gi
        n = jnp.tanh(i_n + r * (h_n + bhn_b))
        h_new = (1.0 - z) * n + z * h

        # Lane-dense (multiple-of-128) store, sublane-aligned rows.
        full_ref[i] = h_new.astype(full_ref.dtype)
        return h_new

    h0 = h_ref[...]
    if s_total % t_blk == 0:
        # Static trip count; fully unroll only modest counts to bound vreg pressure.
        h_last = lax.fori_loop(0, t_blk, step, h0, unroll=(t_blk <= 16))
    else:
        # Skip zero-padded trailing timesteps (pure wasted serial matmuls otherwise).
        n_valid = jnp.minimum(t_blk, s_total - tb * t_blk)
        h_last = lax.fori_loop(0, n_valid, step, h0)
    h_ref[...] = h_last


def _pack_gates(w, h_pad):
    """w: (3H, K) packed r|z|n -> (K, 3*h_pad) transposed; each gate padded to h_pad cols."""
    three_h, k = w.shape
    h = three_h // 3
    out = jnp.zeros((k, 3 * h_pad), w.dtype)
    for g in range(3):
        out = out.at[:, g * h_pad:g * h_pad + h].set(w[g * h:(g + 1) * h, :].T)
    return out


def _pack_bias(b, h_pad):
    """b: (3H,) packed r|z|n -> (1, 3*h_pad); each gate padded to h_pad lanes."""
    h = b.shape[0] // 3
    out = jnp.zeros((1, 3 * h_pad), b.dtype)
    for g in range(3):
        out = out.at[0, g * h_pad:g * h_pad + h].set(b[g * h:(g + 1) * h])
    return out


@functools.partial(jax.jit, static_argnames=("t_blk", "batch_blk", "matmul_dtype"))
def gru_forward(x, w_ih, w_hh, b_ih, b_hh, *, t_blk=32, batch_blk=256,
                matmul_dtype=jnp.bfloat16):
    """x: (batch, seq, input_size)  [batch_first, like PyTorch]
    w_ih: (3H, I), w_hh: (3H, H), b_ih/b_hh: (3H,)  [PyTorch packed layout r|z|n]
    Returns (full, last) with shapes (batch, seq, H) and (1, batch, H)."""
    B, S, I = x.shape
    H = w_hh.shape[1]
    f32 = jnp.float32

    Hp = _round_up(H, 128)        # lane-aligned hidden size
    Bp = _round_up(B, 8)          # sublane-aligned batch
    # Batch blocking: keeps the serial recurrent matmul's M dim at/below one MXU tile and
    # exposes a leading "parallel" grid axis (both TensorCores on v7x take half the batch).
    if Bp > batch_blk:
        Bp = _round_up(Bp, batch_blk)
        Bb = batch_blk
    else:
        Bb = Bp
    n_bb = Bp // Bb

    T = min(t_blk, S)             # timesteps per grid step
    Sp = _round_up(S, T)
    n_tb = Sp // T

    # Pack + pad weights into gate-block layout (r|z|n, each gate padded to Hp lanes).
    # Zero padding keeps padded hidden units exactly 0 for all timesteps.
    wih_p = _pack_gates(w_ih.astype(f32), Hp).astype(matmul_dtype)               # (I, 3Hp)
    whh_p = jnp.zeros((Hp, 3 * Hp), f32).at[:H].set(
        _pack_gates(w_hh.astype(f32), Hp)).astype(matmul_dtype)                  # (Hp, 3Hp)

    # Fold biases: r and z gates use (b_i + b_h); the n gate keeps b_in in the input
    # projection and b_hn separately (it sits inside r * (h_n + b_hn)).
    b_fold = jnp.concatenate([b_ih[:2 * H] + b_hh[:2 * H], b_ih[2 * H:]]).astype(f32)
    bi_p = _pack_bias(b_fold, Hp)                                                # (1, 3Hp)
    bhn_p = jnp.zeros((1, Hp), f32).at[0, :H].set(b_hh[2 * H:].astype(f32))      # (1, Hp)

    # Time-major, padded input (Sp, Bp, I).
    x_tm = jnp.transpose(x, (1, 0, 2))
    x_tm = jnp.pad(x_tm, ((0, Sp - S), (0, Bp - B), (0, 0))).astype(matmul_dtype)

    out_dtype = x.dtype

    # VMEM budget from actual block shapes: double-buffered x/out blocks, single-buffered
    # resident weights/biases, fp32 hidden-state + staged-gi scratch. Clamp to the chip's
    # real VMEM capacity (v7x is 64 MiB/TC, not 128 MiB).
    def nbytes(shape, dt):
        return int(np.prod(shape)) * np.dtype(dt).itemsize

    est = (2 * nbytes((T, Bb, I), matmul_dtype)
           + 1 * nbytes((I, 3 * Hp), matmul_dtype)
           + 1 * nbytes((Hp, 3 * Hp), matmul_dtype)
           + 1 * nbytes((1, 3 * Hp), f32)
           + 1 * nbytes((1, Hp), f32)
           + 2 * nbytes((T, Bb, Hp), out_dtype)
           + nbytes((Bb, Hp), f32)
           + nbytes((T, Bb, 3 * Hp), f32))
    try:
        vmem_cap = int(getattr(pltpu.get_tpu_info(), "vmem_capacity_bytes",
                               64 * 1024 * 1024))
    except Exception:  # conservative floor valid on every TPU generation
        vmem_cap = 64 * 1024 * 1024
    vmem_limit = int(min(max(2 * est, 16 * 1024 * 1024), vmem_cap - 4 * 1024 * 1024))

    kernel = functools.partial(_gru_kernel, t_blk=T, b_blk=Bb, h_pad=Hp, s_total=S)

    # Weights/biases are revisited with the same block index every step: single-buffer.
    const_mode = pl.Buffered(1)

    full_pad = pl.pallas_call(
        kernel,
        out_shape=jax.ShapeDtypeStruct((Sp, Bp, Hp), out_dtype),
        grid_spec=pltpu.PrefetchScalarGridSpec(
            num_scalar_prefetch=0,
            grid=(n_bb, n_tb),
            in_specs=[
                pl.BlockSpec((T, Bb, I), lambda bb, tb: (tb, bb, 0)),        # x block
                pl.BlockSpec((I, 3 * Hp), lambda bb, tb: (0, 0),
                             pipeline_mode=const_mode),                      # W_ih^T
                pl.BlockSpec((Hp, 3 * Hp), lambda bb, tb: (0, 0),
                             pipeline_mode=const_mode),                      # W_hh^T
                pl.BlockSpec((1, 3 * Hp), lambda bb, tb: (0, 0),
                             pipeline_mode=const_mode),                      # folded bias
                pl.BlockSpec((1, Hp), lambda bb, tb: (0, 0),
                             pipeline_mode=const_mode),                      # b_hn
            ],
            out_specs=pl.BlockSpec((T, Bb, Hp), lambda bb, tb: (tb, bb, 0)),
            scratch_shapes=[
                pltpu.VMEM((Bb, Hp), jnp.float32),           # carried hidden state
                pltpu.VMEM((T, Bb, 3 * Hp), jnp.float32),    # staged input projection
            ],
        ),
        compiler_params=pltpu.CompilerParams(
            dimension_semantics=("parallel", "arbitrary"),   # batch parallel, time serial
            vmem_limit_bytes=vmem_limit,
        ),
    )(x_tm, wih_p, whh_p, bi_p, bhn_p)

    full = jnp.transpose(full_pad[:S, :B, :H], (1, 0, 2))    # back to (B, S, H)
    last = full[:, -1, :][None]                              # (1, B, H)
    return full, last


def gru_reference(x, w_ih, w_hh, b_ih, b_hh):
    """Pure-JAX fp32 reference (lax.scan) matching torch.nn.GRU semantics."""
    B, S, I = x.shape
    H = w_hh.shape[1]

    def step(h, x_t):
        gi = x_t @ w_ih.T + b_ih
        gh = h @ w_hh.T + b_hh
        i_r, i_z, i_n = gi[:, :H], gi[:, H:2 * H], gi[:, 2 * H:]
        h_r, h_z, h_n = gh[:, :H], gh[:, H:2 * H], gh[:, 2 * H:]
        r = jax.nn.sigmoid(i_r + h_r)
        z = jax.nn.sigmoid(i_z + h_z)
        n = jnp.tanh(i_n + r * h_n)
        h_new = (1.0 - z) * n + z * h
        return h_new, h_new

    h0 = jnp.zeros((B, H), x.dtype)
    h_last, hs = lax.scan(step, h0, jnp.transpose(x, (1, 0, 2)))
    return jnp.transpose(hs, (1, 0, 2)), h_last[None]


if __name__ == "__main__":
    batch, seq, input_size, hidden_size = 2, 8, 4, 32

    key = jax.random.PRNGKey(0)
    kx, k1, k2, k3, k4 = jax.random.split(key, 5)

    # Same parameterization as torch.nn.GRU: uniform(-k, k), k = 1/sqrt(H).
    bound = 1.0 / (hidden_size ** 0.5)
    x = jax.random.normal(kx, (batch, seq, input_size), dtype=jnp.float32)
    w_ih = jax.random.uniform(k1, (3 * hidden_size, input_size), jnp.float32, -bound, bound)
    w_hh = jax.random.uniform(k2, (3 * hidden_size, hidden_size), jnp.float32, -bound, bound)
    b_ih = jax.random.uniform(k3, (3 * hidden_size,), jnp.float32, -bound, bound)
    b_hh = jax.random.uniform(k4, (3 * hidden_size,), jnp.float32, -bound, bound)

    full_ref, last_ref = gru_reference(x, w_ih, w_hh, b_ih, b_hh)

    # fp32 matmul path: exact-semantics check against the reference.
    full32, last32 = gru_forward(x, w_ih, w_hh, b_ih, b_hh, matmul_dtype=jnp.float32)
    jax.block_until_ready((full32, last32))
    assert full32.shape == (batch, seq, hidden_size)
    assert last32.shape == (1, batch, hidden_size)
    assert jnp.allclose(full32, full_ref, atol=1e-4, rtol=1e-4)
    assert jnp.allclose(last32, last_ref, atol=1e-4, rtol=1e-4)

    # Default bf16-matmul path (fp32 carry / gate math): looser tolerance per bf16 rounding.
    full, last = gru_forward(x, w_ih, w_hh, b_ih, b_hh)
    jax.block_until_ready((full, last))
    assert full.shape == (batch, seq, hidden_size)
    assert last.shape == (1, batch, hidden_size)
    assert jnp.allclose(full, full_ref, atol=3e-2, rtol=3e-2)
    assert jnp.allclose(last, last_ref, atol=3e-2, rtol=3e-2)

    print("KERNEL_OK")
</pallas_src>

<mosaic_0001>
module attributes {stable_mosaic.version = 11 : i64} {
  func.func @_gru_kernel(%arg0: i32, %arg1: i32, %arg2: memref<8x8x4xf32, #tpu.memory_space<vmem>>, %arg3: memref<4x384xf32, #tpu.memory_space<vmem>>, %arg4: memref<128x384xf32, #tpu.memory_space<vmem>>, %arg5: memref<1x384xf32, #tpu.memory_space<vmem>>, %arg6: memref<1x128xf32, #tpu.memory_space<vmem>>, %arg7: memref<8x8x128xf32, #tpu.memory_space<vmem>>, %arg8: memref<8x128xf32, #tpu.memory_space<vmem>>, %arg9: memref<8x8x384xf32, #tpu.memory_space<vmem>>) attributes {dimension_semantics = [#tpu.dimension_semantics<parallel>, #tpu.dimension_semantics<arbitrary>], iteration_bounds = array<i64: 1, 1>, scalar_prefetch = 0 : i64, scratch_operands = 2 : i64, tpu.core_type = #tpu.core_type<tc>, window_params = [{transform_indices = @transform_0, window_bounds = array<i64: 8, 8, 4>}, {pipeline_mode = #tpu.pipeline_mode<synchronous>, transform_indices = @transform_1, window_bounds = array<i64: 4, 384>}, {pipeline_mode = #tpu.pipeline_mode<synchronous>, transform_indices = @transform_2, window_bounds = array<i64: 128, 384>}, {pipeline_mode = #tpu.pipeline_mode<synchronous>, transform_indices = @transform_3, window_bounds = array<i64: 1, 384>}, {pipeline_mode = #tpu.pipeline_mode<synchronous>, transform_indices = @transform_4, window_bounds = array<i64: 1, 128>}, {transform_indices = @transform_5, window_bounds = array<i64: 8, 8, 128>}]} {
    %c0_i32 = arith.constant 0 : i32
    %0 = arith.cmpi eq, %arg1, %c0_i32 : i32
    %1 = arith.extui %0 : i1 to i32
    %c0_i32_0 = arith.constant 0 : i32
    %2 = arith.cmpi ne, %1, %c0_i32_0 : i32
    scf.if %2 {
      %cst_97 = arith.constant 0.000000e+00 : f32
      %305 = vector.broadcast %cst_97 : f32 to vector<8x128xf32>
      %c0_98 = arith.constant 0 : index
      %c0_99 = arith.constant 0 : index
      %306 = vector.load %arg8[%c0_98, %c0_99] : memref<8x128xf32, #tpu.memory_space<vmem>>, vector<8x128xf32>
      tpu.vector_store %arg8[%c0_98, %c0_99], %305 {strides = array<i32>} : memref<8x128xf32, #tpu.memory_space<vmem>>, vector<8x128xf32>,
    } else {
    }
    %c0 = arith.constant 0 : index
    %c0_1 = arith.constant 0 : index
    %c0_2 = arith.constant 0 : index
    %3 = vector.load %arg2[%c0, %c0_1, %c0_2] : memref<8x8x4xf32, #tpu.memory_space<vmem>>, vector<8x8x4xf32>
    %4 = vector.shape_cast %3 : vector<8x8x4xf32> to vector<64x4xf32>
    %c0_3 = arith.constant 0 : index
    %c0_4 = arith.constant 0 : index
    %5 = vector.load %arg3[%c0_3, %c0_4] : memref<4x384xf32, #tpu.memory_space<vmem>>, vector<4x384xf32>
    %cst = arith.constant dense<0.000000e+00> : vector<64x384xf32>
    %6 = tpu.matmul %4, %5, %cst {dimension_numbers = #tpu.dot_dimension_numbers<[1], [0], [0], [1], [0, 0, 1, 1], [], []>} : vector<64x4xf32>, vector<4x384xf32>, vector<64x384xf32> -> vector<64x384xf32>
    %c0_5 = arith.constant 0 : index
    %c0_6 = arith.constant 0 : index
    %7 = vector.load %arg5[%c0_5, %c0_6] : memref<1x384xf32, #tpu.memory_space<vmem>>, vector<1x384xf32>
    %8 = vector.broadcast %7 : vector<1x384xf32> to vector<64x384xf32>
    %9 = arith.addf %6, %8 : vector<64x384xf32>
    %10 = vector.shape_cast %9 : vector<64x384xf32> to vector<8x8x384xf32>
    %c0_7 = arith.constant 0 : index
    %c0_8 = arith.constant 0 : index
    %c0_9 = arith.constant 0 : index
    %11 = vector.load %arg9[%c0_7, %c0_8, %c0_9] : memref<8x8x384xf32, #tpu.memory_space<vmem>>, vector<8x8x384xf32>
    tpu.vector_store %arg9[%c0_7, %c0_8, %c0_9], %10 {strides = array<i32>} : memref<8x8x384xf32, #tpu.memory_space<vmem>>, vector<8x8x384xf32>,
    %c0_10 = arith.constant 0 : index
    %c0_11 = arith.constant 0 : index
    %12 = vector.load %arg6[%c0_10, %c0_11] : memref<1x128xf32, #tpu.memory_space<vmem>>, vector<1x128xf32>
    %13 = vector.shape_cast %12 : vector<1x128xf32> to vector<1x128xf32>
    %14 = vector.broadcast %13 : vector<1x128xf32> to vector<8x128xf32>
    %c0_12 = arith.constant 0 : index
    %c0_13 = arith.constant 0 : index
    %15 = vector.load %arg8[%c0_12, %c0_13] : memref<8x128xf32, #tpu.memory_space<vmem>>, vector<8x128xf32>
    %c0_i32_14 = arith.constant 0 : i32
    %16 = arith.index_cast %c0_i32_14 : i32 to index
    %c0_15 = arith.constant 0 : index
    %c0_16 = arith.constant 0 : index
    %17 = vector.load %arg9[%16, %c0_15, %c0_16] : memref<8x8x384xf32, #tpu.memory_space<vmem>>, vector<1x8x384xf32>
    %18 = vector.shape_cast %17 : vector<1x8x384xf32> to vector<8x384xf32>
    %c0_17 = arith.constant 0 : index
    %c0_18 = arith.constant 0 : index
    %19 = vector.load %arg4[%c0_17, %c0_18] : memref<128x384xf32, #tpu.memory_space<vmem>>, vector<128x384xf32>
    %cst_19 = arith.constant dense<0.000000e+00> : vector<8x384xf32>
    %20 = tpu.matmul %15, %19, %cst_19 {dimension_numbers = #tpu.dot_dimension_numbers<[1], [0], [0], [1], [0, 0, 1, 1], [], []>} : vector<8x128xf32>, vector<128x384xf32>, vector<8x384xf32> -> vector<8x384xf32>
    %21 = vector.extract_strided_slice %18 {offsets = [0, 0], sizes = [8, 128], strides = [1, 1]} : vector<8x384xf32> to vector<8x128xf32>
    %22 = vector.extract_strided_slice %18 {offsets = [0, 128], sizes = [8, 128], strides = [1, 1]} : vector<8x384xf32> to vector<8x128xf32>
    %23 = vector.extract_strided_slice %18 {offsets = [0, 256], sizes = [8, 128], strides = [1, 1]} : vector<8x384xf32> to vector<8x128xf32>
    %24 = vector.extract_strided_slice %20 {offsets = [0, 0], sizes = [8, 128], strides = [1, 1]} : vector<8x384xf32> to vector<8x128xf32>
    %25 = vector.extract_strided_slice %20 {offsets = [0, 128], sizes = [8, 128], strides = [1, 1]} : vector<8x384xf32> to vector<8x128xf32>
    %26 = vector.extract_strided_slice %20 {offsets = [0, 256], sizes = [8, 128], strides = [1, 1]} : vector<8x384xf32> to vector<8x128xf32>
    %27 = arith.addf %21, %24 : vector<8x128xf32>
    %28 = arith.negf %27 : vector<8x128xf32>
    %29 = math.exp %28 : vector<8x128xf32>
    %cst_20 = arith.constant 1.000000e+00 : f32
    %30 = vector.broadcast %cst_20 : f32 to vector<8x128xf32>
    %31 = arith.addf %30, %29 : vector<8x128xf32>
    %32 = arith.divf %30, %31 : vector<8x128xf32>
    %33 = arith.addf %22, %25 : vector<8x128xf32>
    %34 = arith.negf %33 : vector<8x128xf32>
    %35 = math.exp %34 : vector<8x128xf32>
    %cst_21 = arith.constant 1.000000e+00 : f32
    %36 = vector.broadcast %cst_21 : f32 to vector<8x128xf32>
    %37 = arith.addf %36, %35 : vector<8x128xf32>
    %38 = arith.divf %36, %37 : vector<8x128xf32>
    %39 = arith.addf %26, %14 : vector<8x128xf32>
    %40 = arith.mulf %32, %39 : vector<8x128xf32>
    %41 = arith.addf %23, %40 : vector<8x128xf32>
    %42 = math.tanh %41 : vector<8x128xf32>
    %cst_22 = arith.constant 1.000000e+00 : f32
    %43 = vector.broadcast %cst_22 : f32 to vector<8x128xf32>
    %44 = arith.subf %43, %38 : vector<8x128xf32>
    %45 = arith.mulf %44, %42 : vector<8x128xf32>
    %46 = arith.mulf %38, %15 : vector<8x128xf32>
    %47 = arith.addf %45, %46 : vector<8x128xf32>
    %48 = arith.index_cast %c0_i32_14 : i32 to index
    %c0_23 = arith.constant 0 : index
    %c0_24 = arith.constant 0 : index
    %49 = vector.load %arg7[%48, %c0_23, %c0_24] : memref<8x8x128xf32, #tpu.memory_space<vmem>>, vector<1x8x128xf32>
    %50 = vector.shape_cast %49 : vector<1x8x128xf32> to vector<8x128xf32>
    %51 = vector.shape_cast %47 : vector<8x128xf32> to vector<1x8x128xf32>
    tpu.vector_store %arg7[%48, %c0_23, %c0_24], %51 {strides = array<i32>} : memref<8x8x128xf32, #tpu.memory_space<vmem>>, vector<1x8x128xf32>,
    %c1_i32 = arith.constant 1 : i32
    %52 = arith.index_cast %c1_i32 : i32 to index
    %c0_25 = arith.constant 0 : index
    %c0_26 = arith.constant 0 : index
    %53 = vector.load %arg9[%52, %c0_25, %c0_26] : memref<8x8x384xf32, #tpu.memory_space<vmem>>, vector<1x8x384xf32>
    %54 = vector.shape_cast %53 : vector<1x8x384xf32> to vector<8x384xf32>
    %c0_27 = arith.constant 0 : index
    %c0_28 = arith.constant 0 : index
    %55 = vector.load %arg4[%c0_27, %c0_28] : memref<128x384xf32, #tpu.memory_space<vmem>>, vector<128x384xf32>
    %cst_29 = arith.constant dense<0.000000e+00> : vector<8x384xf32>
    %56 = tpu.matmul %47, %55, %cst_29 {dimension_numbers = #tpu.dot_dimension_numbers<[1], [0], [0], [1], [0, 0, 1, 1], [], []>} : vector<8x128xf32>, vector<128x384xf32>, vector<8x384xf32> -> vector<8x384xf32>
    %57 = vector.extract_strided_slice %54 {offsets = [0, 0], sizes = [8, 128], strides = [1, 1]} : vector<8x384xf32> to vector<8x128xf32>
    %58 = vector.extract_strided_slice %54 {offsets = [0, 128], sizes = [8, 128], strides = [1, 1]} : vector<8x384xf32> to vector<8x128xf32>
    %59 = vector.extract_strided_slice %54 {offsets = [0, 256], sizes = [8, 128], strides = [1, 1]} : vector<8x384xf32> to vector<8x128xf32>
    %60 = vector.extract_strided_slice %56 {offsets = [0, 0], sizes = [8, 128], strides = [1, 1]} : vector<8x384xf32> to vector<8x128xf32>
    %61 = vector.extract_strided_slice %56 {offsets = [0, 128], sizes = [8, 128], strides = [1, 1]} : vector<8x384xf32> to vector<8x128xf32>
    %62 = vector.extract_strided_slice %56 {offsets = [0, 256], sizes = [8, 128], strides = [1, 1]} : vector<8x384xf32> to vector<8x128xf32>
    %63 = arith.addf %57, %60 : vector<8x128xf32>
    %64 = arith.negf %63 : vector<8x128xf32>
    %65 = math.exp %64 : vector<8x128xf32>
    %cst_30 = arith.constant 1.000000e+00 : f32
    %66 = vector.broadcast %cst_30 : f32 to vector<8x128xf32>
    %67 = arith.addf %66, %65 : vector<8x128xf32>
    %68 = arith.divf %66, %67 : vector<8x128xf32>
    %69 = arith.addf %58, %61 : vector<8x128xf32>
    %70 = arith.negf %69 : vector<8x128xf32>
    %71 = math.exp %70 : vector<8x128xf32>
    %cst_31 = arith.constant 1.000000e+00 : f32
    %72 = vector.broadcast %cst_31 : f32 to vector<8x128xf32>
    %73 = arith.addf %72, %71 : vector<8x128xf32>
    %74 = arith.divf %72, %73 : vector<8x128xf32>
    %75 = arith.addf %62, %14 : vector<8x128xf32>
    %76 = arith.mulf %68, %75 : vector<8x128xf32>
    %77 = arith.addf %59, %76 : vector<8x128xf32>
    %78 = math.tanh %77 : vector<8x128xf32>
    %cst_32 = arith.constant 1.000000e+00 : f32
    %79 = vector.broadcast %cst_32 : f32 to vector<8x128xf32>
    %80 = arith.subf %79, %74 : vector<8x128xf32>
    %81 = arith.mulf %80, %78 : vector<8x128xf32>
    %82 = arith.mulf %74, %47 : vector<8x128xf32>
    %83 = arith.addf %81, %82 : vector<8x128xf32>
    %84 = arith.index_cast %c1_i32 : i32 to index
    %c0_33 = arith.constant 0 : index
    %c0_34 = arith.constant 0 : index
    %85 = vector.load %arg7[%84, %c0_33, %c0_34] : memref<8x8x128xf32, #tpu.memory_space<vmem>>, vector<1x8x128xf32>
    %86 = vector.shape_cast %85 : vector<1x8x128xf32> to vector<8x128xf32>
    %87 = vector.shape_cast %83 : vector<8x128xf32> to vector<1x8x128xf32>
    tpu.vector_store %arg7[%84, %c0_33, %c0_34], %87 {strides = array<i32>} : memref<8x8x128xf32, #tpu.memory_space<vmem>>, vector<1x8x128xf32>,
    %c2_i32 = arith.constant 2 : i32
    %88 = arith.index_cast %c2_i32 : i32 to index
    %c0_35 = arith.constant 0 : index
    %c0_36 = arith.constant 0 : index
    %89 = vector.load %arg9[%88, %c0_35, %c0_36] : memref<8x8x384xf32, #tpu.memory_space<vmem>>, vector<1x8x384xf32>
    %90 = vector.shape_cast %89 : vector<1x8x384xf32> to vector<8x384xf32>
    %c0_37 = arith.constant 0 : index
    %c0_38 = arith.constant 0 : index
    %91 = vector.load %arg4[%c0_37, %c0_38] : memref<128x384xf32, #tpu.memory_space<vmem>>, vector<128x384xf32>
    %cst_39 = arith.constant dense<0.000000e+00> : vector<8x384xf32>
    %92 = tpu.matmul %83, %91, %cst_39 {dimension_numbers = #tpu.dot_dimension_numbers<[1], [0], [0], [1], [0, 0, 1, 1], [], []>} : vector<8x128xf32>, vector<128x384xf32>, vector<8x384xf32> -> vector<8x384xf32>
    %93 = vector.extract_strided_slice %90 {offsets = [0, 0], sizes = [8, 128], strides = [1, 1]} : vector<8x384xf32> to vector<8x128xf32>
    %94 = vector.extract_strided_slice %90 {offsets = [0, 128], sizes = [8, 128], strides = [1, 1]} : vector<8x384xf32> to vector<8x128xf32>
    %95 = vector.extract_strided_slice %90 {offsets = [0, 256], sizes = [8, 128], strides = [1, 1]} : vector<8x384xf32> to vector<8x128xf32>
    %96 = vector.extract_strided_slice %92 {offsets = [0, 0], sizes = [8, 128], strides = [1, 1]} : vector<8x384xf32> to vector<8x128xf32>
    %97 = vector.extract_strided_slice %92 {offsets = [0, 128], sizes = [8, 128], strides = [1, 1]} : vector<8x384xf32> to vector<8x128xf32>
    %98 = vector.extract_strided_slice %92 {offsets = [0, 256], sizes = [8, 128], strides = [1, 1]} : vector<8x384xf32> to vector<8x128xf32>
    %99 = arith.addf %93, %96 : vector<8x128xf32>
    %100 = arith.negf %99 : vector<8x128xf32>
    %101 = math.exp %100 : vector<8x128xf32>
    %cst_40 = arith.constant 1.000000e+00 : f32
    %102 = vector.broadcast %cst_40 : f32 to vector<8x128xf32>
    %103 = arith.addf %102, %101 : vector<8x128xf32>
    %104 = arith.divf %102, %103 : vector<8x128xf32>
    %105 = arith.addf %94, %97 : vector<8x128xf32>
    %106 = arith.negf %105 : vector<8x128xf32>
    %107 = math.exp %106 : vector<8x128xf32>
    %cst_41 = arith.constant 1.000000e+00 : f32
    %108 = vector.broadcast %cst_41 : f32 to vector<8x128xf32>
    %109 = arith.addf %108, %107 : vector<8x128xf32>
    %110 = arith.divf %108, %109 : vector<8x128xf32>
    %111 = arith.addf %98, %14 : vector<8x128xf32>
    %112 = arith.mulf %104, %111 : vector<8x128xf32>
    %113 = arith.addf %95, %112 : vector<8x128xf32>
    %114 = math.tanh %113 : vector<8x128xf32>
    %cst_42 = arith.constant 1.000000e+00 : f32
    %115 = vector.broadcast %cst_42 : f32 to vector<8x128xf32>
    %116 = arith.subf %115, %110 : vector<8x128xf32>
    %117 = arith.mulf %116, %114 : vector<8x128xf32>
    %118 = arith.mulf %110, %83 : vector<8x128xf32>
    %119 = arith.addf %117, %118 : vector<8x128xf32>
    %120 = arith.index_cast %c2_i32 : i32 to index
    %c0_43 = arith.constant 0 : index
    %c0_44 = arith.constant 0 : index
    %121 = vector.load %arg7[%120, %c0_43, %c0_44] : memref<8x8x128xf32, #tpu.memory_space<vmem>>, vector<1x8x128xf32>
    %122 = vector.shape_cast %121 : vector<1x8x128xf32> to vector<8x128xf32>
    %123 = vector.shape_cast %119 : vector<8x128xf32> to vector<1x8x128xf32>
    tpu.vector_store %arg7[%120, %c0_43, %c0_44], %123 {strides = array<i32>} : memref<8x8x128xf32, #tpu.memory_space<vmem>>, vector<1x8x128xf32>,
    %c3_i32 = arith.constant 3 : i32
    %124 = arith.index_cast %c3_i32 : i32 to index
    %c0_45 = arith.constant 0 : index
    %c0_46 = arith.constant 0 : index
    %125 = vector.load %arg9[%124, %c0_45, %c0_46] : memref<8x8x384xf32, #tpu.memory_space<vmem>>, vector<1x8x384xf32>
    %126 = vector.shape_cast %125 : vector<1x8x384xf32> to vector<8x384xf32>
    %c0_47 = arith.constant 0 : index
    %c0_48 = arith.constant 0 : index
    %127 = vector.load %arg4[%c0_47, %c0_48] : memref<128x384xf32, #tpu.memory_space<vmem>>, vector<128x384xf32>
    %cst_49 = arith.constant dense<0.000000e+00> : vector<8x384xf32>
    %128 = tpu.matmul %119, %127, %cst_49 {dimension_numbers = #tpu.dot_dimension_numbers<[1], [0], [0], [1], [0, 0, 1, 1], [], []>} : vector<8x128xf32>, vector<128x384xf32>, vector<8x384xf32> -> vector<8x384xf32>
    %129 = vector.extract_strided_slice %126 {offsets = [0, 0], sizes = [8, 128], strides = [1, 1]} : vector<8x384xf32> to vector<8x128xf32>
    %130 = vector.extract_strided_slice %126 {offsets = [0, 128], sizes = [8, 128], strides = [1, 1]} : vector<8x384xf32> to vector<8x128xf32>
    %131 = vector.extract_strided_slice %126 {offsets = [0, 256], sizes = [8, 128], strides = [1, 1]} : vector<8x384xf32> to vector<8x128xf32>
    %132 = vector.extract_strided_slice %128 {offsets = [0, 0], sizes = [8, 128], strides = [1, 1]} : vector<8x384xf32> to vector<8x128xf32>
    %133 = vector.extract_strided_slice %128 {offsets = [0, 128], sizes = [8, 128], strides = [1, 1]} : vector<8x384xf32> to vector<8x128xf32>
    %134 = vector.extract_strided_slice %128 {offsets = [0, 256], sizes = [8, 128], strides = [1, 1]} : vector<8x384xf32> to vector<8x128xf32>
    %135 = arith.addf %129, %132 : vector<8x128xf32>
    %136 = arith.negf %135 : vector<8x128xf32>
    %137 = math.exp %136 : vector<8x128xf32>
    %cst_50 = arith.constant 1.000000e+00 : f32
    %138 = vector.broadcast %cst_50 : f32 to vector<8x128xf32>
    %139 = arith.addf %138, %137 : vector<8x128xf32>
    %140 = arith.divf %138, %139 : vector<8x128xf32>
    %141 = arith.addf %130, %133 : vector<8x128xf32>
    %142 = arith.negf %141 : vector<8x128xf32>
    %143 = math.exp %142 : vector<8x128xf32>
    %cst_51 = arith.constant 1.000000e+00 : f32
    %144 = vector.broadcast %cst_51 : f32 to vector<8x128xf32>
    %145 = arith.addf %144, %143 : vector<8x128xf32>
    %146 = arith.divf %144, %145 : vector<8x128xf32>
    %147 = arith.addf %134, %14 : vector<8x128xf32>
    %148 = arith.mulf %140, %147 : vector<8x128xf32>
    %149 = arith.addf %131, %148 : vector<8x128xf32>
    %150 = math.tanh %149 : vector<8x128xf32>
    %cst_52 = arith.constant 1.000000e+00 : f32
    %151 = vector.broadcast %cst_52 : f32 to vector<8x128xf32>
    %152 = arith.subf %151, %146 : vector<8x128xf32>
    %153 = arith.mulf %152, %150 : vector<8x128xf32>
    %154 = arith.mulf %146, %119 : vector<8x128xf32>
    %155 = arith.addf %153, %154 : vector<8x128xf32>
    %156 = arith.index_cast %c3_i32 : i32 to index
    %c0_53 = arith.constant 0 : index
    %c0_54 = arith.constant 0 : index
    %157 = vector.load %arg7[%156, %c0_53, %c0_54] : memref<8x8x128xf32, #tpu.memory_space<vmem>>, vector<1x8x128xf32>
    %158 = vector.shape_cast %157 : vector<1x8x128xf32> to vector<8x128xf32>
    %159 = vector.shape_cast %155 : vector<8x128xf32> to vector<1x8x128xf32>
    tpu.vector_store %arg7[%156, %c0_53, %c0_54], %159 {strides = array<i32>} : memref<8x8x128xf32, #tpu.memory_space<vmem>>, vector<1x8x128xf32>,
    %c4_i32 = arith.constant 4 : i32
    %160 = arith.index_cast %c4_i32 : i32 to index
    %c0_55 = arith.constant 0 : index
    %c0_56 = arith.constant 0 : index
    %161 = vector.load %arg9[%160, %c0_55, %c0_56] : memref<8x8x384xf32, #tpu.memory_space<vmem>>, vector<1x8x384xf32>
    %162 = vector.shape_cast %161 : vector<1x8x384xf32> to vector<8x384xf32>
    %c0_57 = arith.constant 0 : index
    %c0_58 = arith.constant 0 : index
    %163 = vector.load %arg4[%c0_57, %c0_58] : memref<128x384xf32, #tpu.memory_space<vmem>>, vector<128x384xf32>
    %cst_59 = arith.constant dense<0.000000e+00> : vector<8x384xf32>
    %164 = tpu.matmul %155, %163, %cst_59 {dimension_numbers = #tpu.dot_dimension_numbers<[1], [0], [0], [1], [0, 0, 1, 1], [], []>} : vector<8x128xf32>, vector<128x384xf32>, vector<8x384xf32> -> vector<8x384xf32>
    %165 = vector.extract_strided_slice %162 {offsets = [0, 0], sizes = [8, 128], strides = [1, 1]} : vector<8x384xf32> to vector<8x128xf32>
    %166 = vector.extract_strided_slice %162 {offsets = [0, 128], sizes = [8, 128], strides = [1, 1]} : vector<8x384xf32> to vector<8x128xf32>
    %167 = vector.extract_strided_slice %162 {offsets = [0, 256], sizes = [8, 128], strides = [1, 1]} : vector<8x384xf32> to vector<8x128xf32>
    %168 = vector.extract_strided_slice %164 {offsets = [0, 0], sizes = [8, 128], strides = [1, 1]} : vector<8x384xf32> to vector<8x128xf32>
    %169 = vector.extract_strided_slice %164 {offsets = [0, 128], sizes = [8, 128], strides = [1, 1]} : vector<8x384xf32> to vector<8x128xf32>
    %170 = vector.extract_strided_slice %164 {offsets = [0, 256], sizes = [8, 128], strides = [1, 1]} : vector<8x384xf32> to vector<8x128xf32>
    %171 = arith.addf %165, %168 : vector<8x128xf32>
    %172 = arith.negf %171 : vector<8x128xf32>
    %173 = math.exp %172 : vector<8x128xf32>
    %cst_60 = arith.constant 1.000000e+00 : f32
    %174 = vector.broadcast %cst_60 : f32 to vector<8x128xf32>
    %175 = arith.addf %174, %173 : vector<8x128xf32>
    %176 = arith.divf %174, %175 : vector<8x128xf32>
    %177 = arith.addf %166, %169 : vector<8x128xf32>
    %178 = arith.negf %177 : vector<8x128xf32>
    %179 = math.exp %178 : vector<8x128xf32>
    %cst_61 = arith.constant 1.000000e+00 : f32
    %180 = vector.broadcast %cst_61 : f32 to vector<8x128xf32>
    %181 = arith.addf %180, %179 : vector<8x128xf32>
    %182 = arith.divf %180, %181 : vector<8x128xf32>
    %183 = arith.addf %170, %14 : vector<8x128xf32>
    %184 = arith.mulf %176, %183 : vector<8x128xf32>
    %185 = arith.addf %167, %184 : vector<8x128xf32>
    %186 = math.tanh %185 : vector<8x128xf32>
    %cst_62 = arith.constant 1.000000e+00 : f32
    %187 = vector.broadcast %cst_62 : f32 to vector<8x128xf32>
    %188 = arith.subf %187, %182 : vector<8x128xf32>
    %189 = arith.mulf %188, %186 : vector<8x128xf32>
    %190 = arith.mulf %182, %155 : vector<8x128xf32>
    %191 = arith.addf %189, %190 : vector<8x128xf32>
    %192 = arith.index_cast %c4_i32 : i32 to index
    %c0_63 = arith.constant 0 : index
    %c0_64 = arith.constant 0 : index
    %193 = vector.load %arg7[%192, %c0_63, %c0_64] : memref<8x8x128xf32, #tpu.memory_space<vmem>>, vector<1x8x128xf32>
    %194 = vector.shape_cast %193 : vector<1x8x128xf32> to vector<8x128xf32>
    %195 = vector.shape_cast %191 : vector<8x128xf32> to vector<1x8x128xf32>
    tpu.vector_store %arg7[%192, %c0_63, %c0_64], %195 {strides = array<i32>} : memref<8x8x128xf32, #tpu.memory_space<vmem>>, vector<1x8x128xf32>,
    %c5_i32 = arith.constant 5 : i32
    %196 = arith.index_cast %c5_i32 : i32 to index
    %c0_65 = arith.constant 0 : index
    %c0_66 = arith.constant 0 : index
    %197 = vector.load %arg9[%196, %c0_65, %c0_66] : memref<8x8x384xf32, #tpu.memory_space<vmem>>, vector<1x8x384xf32>
    %198 = vector.shape_cast %197 : vector<1x8x384xf32> to vector<8x384xf32>
    %c0_67 = arith.constant 0 : index
    %c0_68 = arith.constant 0 : index
    %199 = vector.load %arg4[%c0_67, %c0_68] : memref<128x384xf32, #tpu.memory_space<vmem>>, vector<128x384xf32>
    %cst_69 = arith.constant dense<0.000000e+00> : vector<8x384xf32>
    %200 = tpu.matmul %191, %199, %cst_69 {dimension_numbers = #tpu.dot_dimension_numbers<[1], [0], [0], [1], [0, 0, 1, 1], [], []>} : vector<8x128xf32>, vector<128x384xf32>, vector<8x384xf32> -> vector<8x384xf32>
    %201 = vector.extract_strided_slice %198 {offsets = [0, 0], sizes = [8, 128], strides = [1, 1]} : vector<8x384xf32> to vector<8x128xf32>
    %202 = vector.extract_strided_slice %198 {offsets = [0, 128], sizes = [8, 128], strides = [1, 1]} : vector<8x384xf32> to vector<8x128xf32>
    %203 = vector.extract_strided_slice %198 {offsets = [0, 256], sizes = [8, 128], strides = [1, 1]} : vector<8x384xf32> to vector<8x128xf32>
    %204 = vector.extract_strided_slice %200 {offsets = [0, 0], sizes = [8, 128], strides = [1, 1]} : vector<8x384xf32> to vector<8x128xf32>
    %205 = vector.extract_strided_slice %200 {offsets = [0, 128], sizes = [8, 128], strides = [1, 1]} : vector<8x384xf32> to vector<8x128xf32>
    %206 = vector.extract_strided_slice %200 {offsets = [0, 256], sizes = [8, 128], strides = [1, 1]} : vector<8x384xf32> to vector<8x128xf32>
    %207 = arith.addf %201, %204 : vector<8x128xf32>
    %208 = arith.negf %207 : vector<8x128xf32>
    %209 = math.exp %208 : vector<8x128xf32>
    %cst_70 = arith.constant 1.000000e+00 : f32
    %210 = vector.broadcast %cst_70 : f32 to vector<8x128xf32>
    %211 = arith.addf %210, %209 : vector<8x128xf32>
    %212 = arith.divf %210, %211 : vector<8x128xf32>
    %213 = arith.addf %202, %205 : vector<8x128xf32>
    %214 = arith.negf %213 : vector<8x128xf32>
    %215 = math.exp %214 : vector<8x128xf32>
    %cst_71 = arith.constant 1.000000e+00 : f32
    %216 = vector.broadcast %cst_71 : f32 to vector<8x128xf32>
    %217 = arith.addf %216, %215 : vector<8x128xf32>
    %218 = arith.divf %216, %217 : vector<8x128xf32>
    %219 = arith.addf %206, %14 : vector<8x128xf32>
    %220 = arith.mulf %212, %219 : vector<8x128xf32>
    %221 = arith.addf %203, %220 : vector<8x128xf32>
    %222 = math.tanh %221 : vector<8x128xf32>
    %cst_72 = arith.constant 1.000000e+00 : f32
    %223 = vector.broadcast %cst_72 : f32 to vector<8x128xf32>
    %224 = arith.subf %223, %218 : vector<8x128xf32>
    %225 = arith.mulf %224, %222 : vector<8x128xf32>
    %226 = arith.mulf %218, %191 : vector<8x128xf32>
    %227 = arith.addf %225, %226 : vector<8x128xf32>
    %228 = arith.index_cast %c5_i32 : i32 to index
    %c0_73 = arith.constant 0 : index
    %c0_74 = arith.constant 0 : index
    %229 = vector.load %arg7[%228, %c0_73, %c0_74] : memref<8x8x128xf32, #tpu.memory_space<vmem>>, vector<1x8x128xf32>
    %230 = vector.shape_cast %229 : vector<1x8x128xf32> to vector<8x128xf32>
    %231 = vector.shape_cast %227 : vector<8x128xf32> to vector<1x8x128xf32>
    tpu.vector_store %arg7[%228, %c0_73, %c0_74], %231 {strides = array<i32>} : memref<8x8x128xf32, #tpu.memory_space<vmem>>, vector<1x8x128xf32>,
    %c6_i32 = arith.constant 6 : i32
    %232 = arith.index_cast %c6_i32 : i32 to index
    %c0_75 = arith.constant 0 : index
    %c0_76 = arith.constant 0 : index
    %233 = vector.load %arg9[%232, %c0_75, %c0_76] : memref<8x8x384xf32, #tpu.memory_space<vmem>>, vector<1x8x384xf32>
    %234 = vector.shape_cast %233 : vector<1x8x384xf32> to vector<8x384xf32>
    %c0_77 = arith.constant 0 : index
    %c0_78 = arith.constant 0 : index
    %235 = vector.load %arg4[%c0_77, %c0_78] : memref<128x384xf32, #tpu.memory_space<vmem>>, vector<128x384xf32>
    %cst_79 = arith.constant dense<0.000000e+00> : vector<8x384xf32>
    %236 = tpu.matmul %227, %235, %cst_79 {dimension_numbers = #tpu.dot_dimension_numbers<[1], [0], [0], [1], [0, 0, 1, 1], [], []>} : vector<8x128xf32>, vector<128x384xf32>, vector<8x384xf32> -> vector<8x384xf32>
    %237 = vector.extract_strided_slice %234 {offsets = [0, 0], sizes = [8, 128], strides = [1, 1]} : vector<8x384xf32> to vector<8x128xf32>
    %238 = vector.extract_strided_slice %234 {offsets = [0, 128], sizes = [8, 128], strides = [1, 1]} : vector<8x384xf32> to vector<8x128xf32>
    %239 = vector.extract_strided_slice %234 {offsets = [0, 256], sizes = [8, 128], strides = [1, 1]} : vector<8x384xf32> to vector<8x128xf32>
    %240 = vector.extract_strided_slice %236 {offsets = [0, 0], sizes = [8, 128], strides = [1, 1]} : vector<8x384xf32> to vector<8x128xf32>
    %241 = vector.extract_strided_slice %236 {offsets = [0, 128], sizes = [8, 128], strides = [1, 1]} : vector<8x384xf32> to vector<8x128xf32>
    %242 = vector.extract_strided_slice %236 {offsets = [0, 256], sizes = [8, 128], strides = [1, 1]} : vector<8x384xf32> to vector<8x128xf32>
    %243 = arith.addf %237, %240 : vector<8x128xf32>
    %244 = arith.negf %243 : vector<8x128xf32>
    %245 = math.exp %244 : vector<8x128xf32>
    %cst_80 = arith.constant 1.000000e+00 : f32
    %246 = vector.broadcast %cst_80 : f32 to vector<8x128xf32>
    %247 = arith.addf %246, %245 : vector<8x128xf32>
    %248 = arith.divf %246, %247 : vector<8x128xf32>
    %249 = arith.addf %238, %241 : vector<8x128xf32>
    %250 = arith.negf %249 : vector<8x128xf32>
    %251 = math.exp %250 : vector<8x128xf32>
    %cst_81 = arith.constant 1.000000e+00 : f32
    %252 = vector.broadcast %cst_81 : f32 to vector<8x128xf32>
    %253 = arith.addf %252, %251 : vector<8x128xf32>
    %254 = arith.divf %252, %253 : vector<8x128xf32>
    %255 = arith.addf %242, %14 : vector<8x128xf32>
    %256 = arith.mulf %248, %255 : vector<8x128xf32>
    %257 = arith.addf %239, %256 : vector<8x128xf32>
    %258 = math.tanh %257 : vector<8x128xf32>
    %cst_82 = arith.constant 1.000000e+00 : f32
    %259 = vector.broadcast %cst_82 : f32 to vector<8x128xf32>
    %260 = arith.subf %259, %254 : vector<8x128xf32>
    %261 = arith.mulf %260, %258 : vector<8x128xf32>
    %262 = arith.mulf %254, %227 : vector<8x128xf32>
    %263 = arith.addf %261, %262 : vector<8x128xf32>
    %264 = arith.index_cast %c6_i32 : i32 to index
    %c0_83 = arith.constant 0 : index
    %c0_84 = arith.constant 0 : index
    %265 = vector.load %arg7[%264, %c0_83, %c0_84] : memref<8x8x128xf32, #tpu.memory_space<vmem>>, vector<1x8x128xf32>
    %266 = vector.shape_cast %265 : vector<1x8x128xf32> to vector<8x128xf32>
    %267 = vector.shape_cast %263 : vector<8x128xf32> to vector<1x8x128xf32>
    tpu.vector_store %arg7[%264, %c0_83, %c0_84], %267 {strides = array<i32>} : memref<8x8x128xf32, #tpu.memory_space<vmem>>, vector<1x8x128xf32>,
    %c7_i32 = arith.constant 7 : i32
    %268 = arith.index_cast %c7_i32 : i32 to index
    %c0_85 = arith.constant 0 : index
    %c0_86 = arith.constant 0 : index
    %269 = vector.load %arg9[%268, %c0_85, %c0_86] : memref<8x8x384xf32, #tpu.memory_space<vmem>>, vector<1x8x384xf32>
    %270 = vector.shape_cast %269 : vector<1x8x384xf32> to vector<8x384xf32>
    %c0_87 = arith.constant 0 : index
    %c0_88 = arith.constant 0 : index
    %271 = vector.load %arg4[%c0_87, %c0_88] : memref<128x384xf32, #tpu.memory_space<vmem>>, vector<128x384xf32>
    %cst_89 = arith.constant dense<0.000000e+00> : vector<8x384xf32>
    %272 = tpu.matmul %263, %271, %cst_89 {dimension_numbers = #tpu.dot_dimension_numbers<[1], [0], [0], [1], [0, 0, 1, 1], [], []>} : vector<8x128xf32>, vector<128x384xf32>, vector<8x384xf32> -> vector<8x384xf32>
    %273 = vector.extract_strided_slice %270 {offsets = [0, 0], sizes = [8, 128], strides = [1, 1]} : vector<8x384xf32> to vector<8x128xf32>
    %274 = vector.extract_strided_slice %270 {offsets = [0, 128], sizes = [8, 128], strides = [1, 1]} : vector<8x384xf32> to vector<8x128xf32>
    %275 = vector.extract_strided_slice %270 {offsets = [0, 256], sizes = [8, 128], strides = [1, 1]} : vector<8x384xf32> to vector<8x128xf32>
    %276 = vector.extract_strided_slice %272 {offsets = [0, 0], sizes = [8, 128], strides = [1, 1]} : vector<8x384xf32> to vector<8x128xf32>
    %277 = vector.extract_strided_slice %272 {offsets = [0, 128], sizes = [8, 128], strides = [1, 1]} : vector<8x384xf32> to vector<8x128xf32>
    %278 = vector.extract_strided_slice %272 {offsets = [0, 256], sizes = [8, 128], strides = [1, 1]} : vector<8x384xf32> to vector<8x128xf32>
    %279 = arith.addf %273, %276 : vector<8x128xf32>
    %280 = arith.negf %279 : vector<8x128xf32>
    %281 = math.exp %280 : vector<8x128xf32>
    %cst_90 = arith.constant 1.000000e+00 : f32
    %282 = vector.broadcast %cst_90 : f32 to vector<8x128xf32>
    %283 = arith.addf %282, %281 : vector<8x128xf32>
    %284 = arith.divf %282, %283 : vector<8x128xf32>
    %285 = arith.addf %274, %277 : vector<8x128xf32>
    %286 = arith.negf %285 : vector<8x128xf32>
    %287 = math.exp %286 : vector<8x128xf32>
    %cst_91 = arith.constant 1.000000e+00 : f32
    %288 = vector.broadcast %cst_91 : f32 to vector<8x128xf32>
    %289 = arith.addf %288, %287 : vector<8x128xf32>
    %290 = arith.divf %288, %289 : vector<8x128xf32>
    %291 = arith.addf %278, %14 : vector<8x128xf32>
    %292 = arith.mulf %284, %291 : vector<8x128xf32>
    %293 = arith.addf %275, %292 : vector<8x128xf32>
    %294 = math.tanh %293 : vector<8x128xf32>
    %cst_92 = arith.constant 1.000000e+00 : f32
    %295 = vector.broadcast %cst_92 : f32 to vector<8x128xf32>
    %296 = arith.subf %295, %290 : vector<8x128xf32>
    %297 = arith.mulf %296, %294 : vector<8x128xf32>
    %298 = arith.mulf %290, %263 : vector<8x128xf32>
    %299 = arith.addf %297, %298 : vector<8x128xf32>
    %300 = arith.index_cast %c7_i32 : i32 to index
    %c0_93 = arith.constant 0 : index
    %c0_94 = arith.constant 0 : index
    %301 = vector.load %arg7[%300, %c0_93, %c0_94] : memref<8x8x128xf32, #tpu.memory_space<vmem>>, vector<1x8x128xf32>
    %302 = vector.shape_cast %301 : vector<1x8x128xf32> to vector<8x128xf32>
    %303 = vector.shape_cast %299 : vector<8x128xf32> to vector<1x8x128xf32>
    tpu.vector_store %arg7[%300, %c0_93, %c0_94], %303 {strides = array<i32>} : memref<8x8x128xf32, #tpu.memory_space<vmem>>, vector<1x8x128xf32>,
    %c8_i32 = arith.constant 8 : i32
    %c0_95 = arith.constant 0 : index
    %c0_96 = arith.constant 0 : index
    %304 = vector.load %arg8[%c0_95, %c0_96] : memref<8x128xf32, #tpu.memory_space<vmem>>, vector<8x128xf32>
    tpu.vector_store %arg8[%c0_95, %c0_96], %299 {strides = array<i32>} : memref<8x128xf32, #tpu.memory_space<vmem>>, vector<8x128xf32>,
    return
  }
  func.func @transform_0(%arg0: i32, %arg1: i32) -> (i32, i32, i32) {
    %c0_i32 = arith.constant 0 : i32
    %c0_i32_0 = arith.constant 0 : i32
    return %arg1, %arg0, %c0_i32 : i32, i32, i32
  }
  func.func @transform_1(%arg0: i32, %arg1: i32) -> (i32, i32) {
    %c0_i32 = arith.constant 0 : i32
    %c0_i32_0 = arith.constant 0 : i32
    %c0_i32_1 = arith.constant 0 : i32
    return %c0_i32, %c0_i32_0 : i32, i32
  }
  func.func @transform_2(%arg0: i32, %arg1: i32) -> (i32, i32) {
    %c0_i32 = arith.constant 0 : i32
    %c0_i32_0 = arith.constant 0 : i32
    %c0_i32_1 = arith.constant 0 : i32
    return %c0_i32, %c0_i32_0 : i32, i32
  }
  func.func @transform_3(%arg0: i32, %arg1: i32) -> (i32, i32) {
    %c0_i32 = arith.constant 0 : i32
    %c0_i32_0 = arith.constant 0 : i32
    %c0_i32_1 = arith.constant 0 : i32
    return %c0_i32, %c0_i32_0 : i32, i32
  }
  func.func @transform_4(%arg0: i32, %arg1: i32) -> (i32, i32) {
    %c0_i32 = arith.constant 0 : i32
    %c0_i32_0 = arith.constant 0 : i32
    %c0_i32_1 = arith.constant 0 : i32
    return %c0_i32, %c0_i32_0 : i32, i32
  }
  func.func @transform_5(%arg0: i32, %arg1: i32) -> (i32, i32, i32) {
    %c0_i32 = arith.constant 0 : i32
    %c0_i32_0 = arith.constant 0 : i32
    return %arg1, %arg0, %c0_i32 : i32, i32, i32
  }
}

</mosaic_0001>

<llo_original>
// kernel: gru_forward.1
$region0: #{gru_forward.1}
  #allocation0 [shape = 'u32[]', space=smem, size = 0x4, offset = 0x4, fixed_abs, tag = 'smem constant byte address 0x4 - core index']
  #allocation1 [shape = 'u32[144,128]{1,0:T(1,128)}', space=vmem, size = 0x12000, scoped, tag = 'internal scratch']
  #allocation2 [shape = 'f32[8,128]{1,0:T(8,128)}', space=vmem, size = 0x1000, scoped, tag = 'scratch operand']
  #allocation3 [shape = 'f32[8,8,384]{2,1,0:T(8,128)}', space=vmem, size = 0x18000, scoped, tag = 'scratch operand']
  %s0 = inlined_call_operand.vmem [shape: f32[8,8,4], index: 0, kind: input, shape index: {}]
  %s1 = inlined_call_operand.vmem [shape: f32[4,384], index: 1, kind: input, shape index: {}]
  %s2 = inlined_call_operand.vmem [shape: f32[128,384], index: 2, kind: input, shape index: {}]
  %s3 = inlined_call_operand.vmem [shape: f32[1,384], index: 3, kind: input, shape index: {}]
  %s4 = inlined_call_operand.vmem [shape: f32[1,128], index: 4, kind: input, shape index: {}]
  %s5 = inlined_call_operand.vmem [shape: f32[8,8,128], index: 5, kind: output, shape index: {}]
  %s6 = sld [smem:[#allocation0]]
  $region34: #{gru_forward.1} parent=0
    _
  %s8 = ssub.s32 1, %s6
  %s9 = scalar_select 0, %s8, %s6
  // Predicated region
  $region2: #{gru_forward.1} parent=0 // pred_check
    _
  $region3: #{gru_forward.1} parent=0 // pred_check_branch
    %11 = sbr.rel (0) target = $region5
  $region4: #{gru_forward.1} parent=0 // pred_region
    _
  $region5: #{gru_forward.1} parent=0 // pred_fallthru
    _
  // Predicated region
  $region6: #{gru_forward.1} parent=0 // pred_check
    _
  $region7: #{gru_forward.1} parent=0 // pred_check_branch
    %13 = sbr.rel (0) target = $region9
  $region8: #{gru_forward.1} parent=0 // pred_region
    _
  $region9: #{gru_forward.1} parent=0 // pred_fallthru
    _
  // Predicated region
  $region10: #{gru_forward.1} parent=0 // pred_check
    _
  $region11: #{gru_forward.1} parent=0 // pred_check_branch
    %15 = sbr.rel (0) target = $region13
  $region12: #{gru_forward.1} parent=0 // pred_region
    _
  $region13: #{gru_forward.1} parent=0 // pred_fallthru
    _
  // Predicated region
  $region14: #{gru_forward.1} parent=0 // pred_check
    _
  $region15: #{gru_forward.1} parent=0 // pred_check_branch
    %17 = sbr.rel (0) target = $region17
  $region16: #{gru_forward.1} parent=0 // pred_region
    _
  $region17: #{gru_forward.1} parent=0 // pred_fallthru
    _
  // Predicated region
  $region18: #{gru_forward.1} parent=0 // pred_check
    _
  $region19: #{gru_forward.1} parent=0 // pred_check_branch
    %19 = sbr.rel (0) target = $region21
  $region20: #{gru_forward.1} parent=0 // pred_region
    _
  $region21: #{gru_forward.1} parent=0 // pred_fallthru
    _
  %p20 = scmp.eq.s32.totalorder 0, 0
  // Predicated region
  $region22: #{gru_forward.1} parent=0 // pred_check
    %p21 = pneg %p20
  $region23: #{gru_forward.1} parent=0 // pred_check_branch
    %23 = sbr.rel (%p21) target = $region25
  $region24: #{gru_forward.1} parent=0 // pred_region
    %24 = vst [vmem:[#allocation2] sm:$0xff] 0.0
  $region25: #{gru_forward.1} parent=0 // pred_fallthru
    _
  %v25 = vld [vmem:[%s0] sm:$0xff]
  %v26 = vld [vmem:[%s0 + $0x8] sm:$0xff]
  %v27 = vld [vmem:[%s0 + $0x10] sm:$0xff]
  %v28 = vld [vmem:[%s0 + $0x18] sm:$0xff]
  %v29 = vld [vmem:[%s0 + $0x20] sm:$0xff]
  %v30 = vld [vmem:[%s0 + $0x28] sm:$0xff]
  %v31 = vld [vmem:[%s0 + $0x30] sm:$0xff]
  %v32 = vld [vmem:[%s0 + $0x38] sm:$0xff]
  %v33 = vld [vmem:[%s1] sm:$0xff]
  %v34 = vld [vmem:[%s1 + $0x8] sm:$0xf]
  %v35 = vld [vmem:[%s3] sm:$0x7]
  %v37 = vlaneseq
  %v38 = vshrl.u32 %v37, 7
  %v39 = vsub.s32 0, %v38
  %v40 = vrot.slane %v35, %v39
  %v41 = vlaneseq
  %v42 = vshrl.u32 %v41, 7
  %v43 = vsub.s32 1, %v42
  %v44 = vrot.slane %v35, %v43
  %v45 = vlaneseq
  %v46 = vshrl.u32 %v45, 7
  %v47 = vsub.s32 2, %v46
  %v48 = vrot.slane %v35, %v47
  %v54 = vcombine.high %v33, %v33
  %vm55 = vcmask 31744
  %v57 = vsel %vm55, %v25, 0
  %v60 = vsel %vm55, %v26, 0
  %v63 = vsel %vm55, %v27, 0
  %v66 = vsel %vm55, %v28, 0
  %v69 = vsel %vm55, %v29, 0
  %v72 = vsel %vm55, %v30, 0
  %v75 = vsel %vm55, %v31, 0
  %v78 = vsel %vm55, %v32, 0
  %vm80 = vcmask 1043456
  %v81 = vsel %vm80, %v33, 0
  %v83 = vsel %vm80, %v54, 0
  %v85 = vsel %vm80, %v34, 0
  %87 = vmatprep.subr.mxu0 0.0
  %88 = vmatpush1.msra.mxu0 0.0
  %89 = vmatprep.subr.mxu0 0.0
  %90 = vmatpush1.msra.mxu0 0.0
  %91 = vmatprep.subr.mxu0 0.0
  %92 = vmatpush1.msra.mxu0 0.0
  %93 = vmatprep.subr.mxu0 0.0
  %94 = vmatpush1.msra.mxu0 0.0
  %95 = vmatprep.subr.mxu0 0.0
  %96 = vmatpush1.msra.mxu0 0.0
  %97 = vmatprep.subr.mxu0 0.0
  %98 = vmatpush1.msra.mxu0 0.0
  %99 = vmatprep.subr.mxu0 0.0
  %100 = vmatpush1.msra.mxu0 0.0
  %101 = vmatprep.subr.mxu0 0.0
  %102 = vmatpush1.msra.mxu0 0.0
  %103 = vmatprep.subr.mxu0 0.0
  %104 = vmatpush1.msra.mxu0 0.0
  %105 = vmatprep.subr.mxu0 0.0
  %106 = vmatpush1.msra.mxu0 0.0
  %107 = vmatprep.subr.mxu0 0.0
  %108 = vmatpush1.msra.mxu0 0.0
  %109 = vmatprep.subr.mxu0 0.0
  %110 = vmatpush1.msra.mxu0 0.0
  %111 = vmatprep.subr.mxu0 0.0
  %112 = vmatpush1.msra.mxu0 0.0
  %113 = vmatprep.subr.mxu0 0.0
  %114 = vmatpush1.msra.mxu0 0.0
  %115 = vmatprep.subr.mxu0 0.0
  %116 = vmatpush1.msra.mxu0 0.0
  %117 = vmatprep.subr.mxu0 %v83
  %118 = vmatpush1.msra.mxu0 %v81
  %119 = vmatprep.subr.mxu0 0.0
  %120 = vmatpush2.msra.mxu0 0.0
  %121 = vmatprep.subr.mxu0 0.0
  %122 = vmatpush2.msra.mxu0 0.0
  %123 = vmatprep.subr.mxu0 0.0
  %124 = vmatpush2.msra.mxu0 0.0
  %125 = vmatprep.subr.mxu0 0.0
  %126 = vmatpush2.msra.mxu0 0.0
  %127 = vmatprep.subr.mxu0 0.0
  %128 = vmatpush2.msra.mxu0 0.0
  %129 = vmatprep.subr.mxu0 0.0
  %130 = vmatpush2.msra.mxu0 0.0
  %131 = vmatprep.subr.mxu0 0.0
  %132 = vmatpush2.msra.mxu0 0.0
  %133 = vmatprep.subr.mxu0 0.0
  %134 = vmatpush2.msra.mxu0 0.0
  %135 = vmatprep.subr.mxu0 0.0
  %136 = vmatpush2.msra.mxu0 0.0
  %137 = vmatprep.subr.mxu0 0.0
  %138 = vmatpush2.msra.mxu0 0.0
  %139 = vmatprep.subr.mxu0 0.0
  %140 = vmatpush2.msra.mxu0 0.0
  %141 = vmatprep.subr.mxu0 0.0
  %142 = vmatpush2.msra.mxu0 0.0
  %143 = vmatprep.subr.mxu0 0.0
  %144 = vmatpush2.msra.mxu0 0.0
  %145 = vmatprep.subr.mxu0 0.0
  %146 = vmatpush2.msra.mxu0 0.0
  %147 = vmatprep.subr.mxu0 0.0
  %148 = vmatpush2.msra.mxu0 0.0
  %149 = vmatprep.subr.mxu0 0.0
  %150 = vmatpush2.msra.mxu0 0.0
  %151 = vmatprep.mubr.f32.mxu0 0.0
  %152 = vmatmul.mubr.f32.gmra.mxu0 %v57
  %v153 = vpop.f32.mrf.mxu0
  %v154 = vadd.f32 %v40, %v153
  %v155 = vpop.f32.mrf.mxu0
  %v156 = vadd.f32 %v44, %v155
  %157 = vmatprep.mubr.f32.mxu0 0.0
  %158 = vmatmul.mubr.f32.gmra.mxu0 %v60
  %v159 = vpop.f32.mrf.mxu0
  %v160 = vadd.f32 %v40, %v159
  %v161 = vpop.f32.mrf.mxu0
  %v162 = vadd.f32 %v44, %v161
  %163 = vmatprep.mubr.f32.mxu0 0.0
  %164 = vmatmul.mubr.f32.gmra.mxu0 %v63
  %v165 = vpop.f32.mrf.mxu0
  %v166 = vadd.f32 %v40, %v165
  %v167 = vpop.f32.mrf.mxu0
  %v168 = vadd.f32 %v44, %v167
  %169 = vmatprep.mubr.f32.mxu0 0.0
  %170 = vmatmul.mubr.f32.gmra.mxu0 %v66
  %v171 = vpop.f32.mrf.mxu0
  %v172 = vadd.f32 %v40, %v171
  %v173 = vpop.f32.mrf.mxu0
  %v174 = vadd.f32 %v44, %v173
  %175 = vmatprep.mubr.f32.mxu0 0.0
  %176 = vmatmul.mubr.f32.gmra.mxu0 %v69
  %v177 = vpop.f32.mrf.mxu0
  %v178 = vadd.f32 %v40, %v177
  %v179 = vpop.f32.mrf.mxu0
  %v180 = vadd.f32 %v44, %v179
  %181 = vmatprep.mubr.f32.mxu0 0.0
  %182 = vmatmul.mubr.f32.gmra.mxu0 %v72
  %v183 = vpop.f32.mrf.mxu0
  %v184 = vadd.f32 %v40, %v183
  %v185 = vpop.f32.mrf.mxu0
  %v186 = vadd.f32 %v44, %v185
  %187 = vmatprep.mubr.f32.mxu0 0.0
  %188 = vmatmul.mubr.f32.gmra.mxu0 %v75
  %v189 = vpop.f32.mrf.mxu0
  %v190 = vadd.f32 %v40, %v189
  %v191 = vpop.f32.mrf.mxu0
  %v192 = vadd.f32 %v44, %v191
  %193 = vmatprep.mubr.f32.mxu0 0.0
  %194 = vmatmul.mubr.f32.gmra.mxu0 %v78
  %v195 = vpop.f32.mrf.mxu0
  %v196 = vadd.f32 %v40, %v195
  %v197 = vpop.f32.mrf.mxu0
  %v198 = vadd.f32 %v44, %v197
  %199 = vdwg.mxu0
  %200 = vmatprep.subr.mxu0 0.0
  %201 = vmatpush1.msra.mxu0 0.0
  %202 = vmatprep.subr.mxu0 0.0
  %203 = vmatpush1.msra.mxu0 0.0
  %204 = vmatprep.subr.mxu0 0.0
  %205 = vmatpush1.msra.mxu0 0.0
  %206 = vmatprep.subr.mxu0 0.0
  %207 = vmatpush1.msra.mxu0 0.0
  %208 = vmatprep.subr.mxu0 0.0
  %209 = vmatpush1.msra.mxu0 0.0
  %210 = vmatprep.subr.mxu0 0.0
  %211 = vmatpush1.msra.mxu0 0.0
  %212 = vmatprep.subr.mxu0 0.0
  %213 = vmatpush1.msra.mxu0 0.0
  %214 = vmatprep.subr.mxu0 0.0
  %215 = vmatpush1.msra.mxu0 0.0
  %216 = vmatprep.subr.mxu0 0.0
  %217 = vmatpush1.msra.mxu0 0.0
  %218 = vmatprep.subr.mxu0 0.0
  %219 = vmatpush1.msra.mxu0 0.0
  %220 = vmatprep.subr.mxu0 0.0
  %221 = vmatpush1.msra.mxu0 0.0
  %222 = vmatprep.subr.mxu0 0.0
  %223 = vmatpush1.msra.mxu0 0.0
  %224 = vmatprep.subr.mxu0 0.0
  %225 = vmatpush1.msra.mxu0 0.0
  %226 = vmatprep.subr.mxu0 0.0
  %227 = vmatpush1.msra.mxu0 0.0
  %228 = vmatprep.subr.mxu0 0.0
  %229 = vmatpush1.msra.mxu0 0.0
  %230 = vmatprep.subr.mxu0 0.0
  %231 = vmatpush1.msra.mxu0 %v85
  %232 = vmatprep.subr.mxu0 0.0
  %233 = vmatpush2.msra.mxu0 0.0
  %234 = vmatprep.subr.mxu0 0.0
  %235 = vmatpush2.msra.mxu0 0.0
  %236 = vmatprep.subr.mxu0 0.0
  %237 = vmatpush2.msra.mxu0 0.0
  %238 = vmatprep.subr.mxu0 0.0
  %239 = vmatpush2.msra.mxu0 0.0
  %240 = vmatprep.subr.mxu0 0.0
  %241 = vmatpush2.msra.mxu0 0.0
  %242 = vmatprep.subr.mxu0 0.0
  %243 = vmatpush2.msra.mxu0 0.0
  %244 = vmatprep.subr.mxu0 0.0
  %245 = vmatpush2.msra.mxu0 0.0
  %246 = vmatprep.subr.mxu0 0.0
  %247 = vmatpush2.msra.mxu0 0.0
  %248 = vmatprep.subr.mxu0 0.0
  %249 = vmatpush2.msra.mxu0 0.0
  %250 = vmatprep.subr.mxu0 0.0
  %251 = vmatpush2.msra.mxu0 0.0
  %252 = vmatprep.subr.mxu0 0.0
  %253 = vmatpush2.msra.mxu0 0.0
  %254 = vmatprep.subr.mxu0 0.0
  %255 = vmatpush2.msra.mxu0 0.0
  %256 = vmatprep.subr.mxu0 0.0
  %257 = vmatpush2.msra.mxu0 0.0
  %258 = vmatprep.subr.mxu0 0.0
  %259 = vmatpush2.msra.mxu0 0.0
  %260 = vmatprep.subr.mxu0 0.0
  %261 = vmatpush2.msra.mxu0 0.0
  %262 = vmatprep.subr.mxu0 0.0
  %263 = vmatpush2.msra.mxu0 0.0
  %264 = vmatprep.mubr.f32.mxu0 0.0
  %265 = vmatmul.mubr.f32.gmra.mxu0 %v57
  %v266 = vpop.f32.mrf.mxu0
  %v267 = vadd.f32 %v48, %v266
  %v268 = vpop.f32.mrf.mxu0
  %269 = vmatprep.mubr.f32.mxu0 0.0
  %270 = vmatmul.mubr.f32.gmra.mxu0 %v60
  %v271 = vpop.f32.mrf.mxu0
  %v272 = vadd.f32 %v48, %v271
  %v273 = vpop.f32.mrf.mxu0
  %274 = vmatprep.mubr.f32.mxu0 0.0
  %275 = vmatmul.mubr.f32.gmra.mxu0 %v63
  %v276 = vpop.f32.mrf.mxu0
  %v277 = vadd.f32 %v48, %v276
  %v278 = vpop.f32.mrf.mxu0
  %279 = vmatprep.mubr.f32.mxu0 0.0
  %280 = vmatmul.mubr.f32.gmra.mxu0 %v66
  %v281 = vpop.f32.mrf.mxu0
  %v282 = vadd.f32 %v48, %v281
  %v283 = vpop.f32.mrf.mxu0
  %284 = vmatprep.mubr.f32.mxu0 0.0
  %285 = vmatmul.mubr.f32.gmra.mxu0 %v69
  %v286 = vpop.f32.mrf.mxu0
  %v287 = vadd.f32 %v48, %v286
  %v288 = vpop.f32.mrf.mxu0
  %289 = vmatprep.mubr.f32.mxu0 0.0
  %290 = vmatmul.mubr.f32.gmra.mxu0 %v72
  %v291 = vpop.f32.mrf.mxu0
  %v292 = vadd.f32 %v48, %v291
  %v293 = vpop.f32.mrf.mxu0
  %294 = vmatprep.mubr.f32.mxu0 0.0
  %295 = vmatmul.mubr.f32.gmra.mxu0 %v75
  %v296 = vpop.f32.mrf.mxu0
  %v297 = vadd.f32 %v48, %v296
  %v298 = vpop.f32.mrf.mxu0
  %299 = vmatprep.mubr.f32.mxu0 0.0
  %300 = vmatmul.mubr.f32.gmra.mxu0 %v78
  %v301 = vpop.f32.mrf.mxu0
  %v302 = vadd.f32 %v48, %v301
  %v303 = vpop.f32.mrf.mxu0
  %304 = vdwg.mxu0
  %305 = vst [vmem:[#allocation3] sm:$0xff] %v154
  %306 = vst [vmem:[#allocation3 + $0x8] sm:$0xff] %v156
  %307 = vst [vmem:[#allocation3 + $0x10] sm:$0xff] %v267
  %308 = vst [vmem:[#allocation3 + $0x18] sm:$0xff] %v160
  %309 = vst [vmem:[#allocation3 + $0x20] sm:$0xff] %v162
  %310 = vst [vmem:[#allocation3 + $0x28] sm:$0xff] %v272
  %311 = vst [vmem:[#allocation3 + $0x30] sm:$0xff] %v166
  %312 = vst [vmem:[#allocation3 + $0x38] sm:$0xff] %v168
  %313 = vst [vmem:[#allocation3 + $0x40] sm:$0xff] %v277
  %314 = vst [vmem:[#allocation3 + $0x48] sm:$0xff] %v172
  %315 = vst [vmem:[#allocation3 + $0x50] sm:$0xff] %v174
  %316 = vst [vmem:[#allocation3 + $0x58] sm:$0xff] %v282
  %317 = vst [vmem:[#allocation3 + $0x60] sm:$0xff] %v178
  %318 = vst [vmem:[#allocation3 + $0x68] sm:$0xff] %v180
  %319 = vst [vmem:[#allocation3 + $0x70] sm:$0xff] %v287
  %320 = vst [vmem:[#allocation3 + $0x78] sm:$0xff] %v184
  %321 = vst [vmem:[#allocation3 + $0x80] sm:$0xff] %v186
  %322 = vst [vmem:[#allocation3 + $0x88] sm:$0xff] %v292
  %323 = vst [vmem:[#allocation3 + $0x90] sm:$0xff] %v190
  %324 = vst [vmem:[#allocation3 + $0x98] sm:$0xff] %v192
  %325 = vst [vmem:[#allocation3 + $0xa0] sm:$0xff] %v297
  %326 = vst [vmem:[#allocation3 + $0xa8] sm:$0xff] %v196
  %327 = vst [vmem:[#allocation3 + $0xb0] sm:$0xff] %v198
  %328 = vst [vmem:[#allocation3 + $0xb8] sm:$0xff] %v302
  %v329 = vld [vmem:[%s4] sm:$0x1]
  %v331 = vlaneseq
  %v332 = vshrl.u32 %v331, 7
  %v333 = vsub.s32 0, %v332
  %v334 = vrot.slane %v329, %v333
  %v336 = vld [vmem:[#allocation2] sm:$0xff]
  %v337 = vld [vmem:[#allocation3] sm:$0xff]
  %v338 = vld [vmem:[#allocation3 + $0x8] sm:$0xff]
  %v339 = vld [vmem:[#allocation3 + $0x10] sm:$0xff]
  %v340 = vld [vmem:[%s2] sm:$0xff]
  %v341 = vld [vmem:[%s2 + $0x8] sm:$0xff]
  %v342 = vld [vmem:[%s2 + $0x10] sm:$0xff]
  %v343 = vld [vmem:[%s2 + $0x18] sm:$0xff]
  %v344 = vld [vmem:[%s2 + $0x20] sm:$0xff]
  %v345 = vld [vmem:[%s2 + $0x28] sm:$0xff]
  %v346 = vld [vmem:[%s2 + $0x30] sm:$0xff]
  %v347 = vld [vmem:[%s2 + $0x38] sm:$0xff]
  %v348 = vld [vmem:[%s2 + $0x40] sm:$0xff]
  %v349 = vld [vmem:[%s2 + $0x48] sm:$0xff]
  %v350 = vld [vmem:[%s2 + $0x50] sm:$0xff]
  %v351 = vld [vmem:[%s2 + $0x58] sm:$0xff]
  %v352 = vld [vmem:[%s2 + $0x60] sm:$0xff]
  %v353 = vld [vmem:[%s2 + $0x68] sm:$0xff]
  %v354 = vld [vmem:[%s2 + $0x70] sm:$0xff]
  %v355 = vld [vmem:[%s2 + $0x78] sm:$0xff]
  %v356 = vld [vmem:[%s2 + $0x80] sm:$0xff]
  %v357 = vld [vmem:[%s2 + $0x88] sm:$0xff]
  %v358 = vld [vmem:[%s2 + $0x90] sm:$0xff]
  %v359 = vld [vmem:[%s2 + $0x98] sm:$0xff]
  %v360 = vld [vmem:[%s2 + $0xa0] sm:$0xff]
  %v361 = vld [vmem:[%s2 + $0xa8] sm:$0xff]
  %v362 = vld [vmem:[%s2 + $0xb0] sm:$0xff]
  %v363 = vld [vmem:[%s2 + $0xb8] sm:$0xff]
  %v364 = vld [vmem:[%s2 + $0xc0] sm:$0xff]
  %v365 = vld [vmem:[%s2 + $0xc8] sm:$0xff]
  %v366 = vld [vmem:[%s2 + $0xd0] sm:$0xff]
  %v367 = vld [vmem:[%s2 + $0xd8] sm:$0xff]
  %v368 = vld [vmem:[%s2 + $0xe0] sm:$0xff]
  %v369 = vld [vmem:[%s2 + $0xe8] sm:$0xff]
  %v370 = vld [vmem:[%s2 + $0xf0] sm:$0xff]
  %v371 = vld [vmem:[%s2 + $0xf8] sm:$0xff]
  %v372 = vld [vmem:[%s2 + $0x100] sm:$0xff]
  %v373 = vld [vmem:[%s2 + $0x108] sm:$0xff]
  %v374 = vld [vmem:[%s2 + $0x110] sm:$0xff]
  %v375 = vld [vmem:[%s2 + $0x118] sm:$0xff]
  %v376 = vld [vmem:[%s2 + $0x120] sm:$0xff]
  %v377 = vld [vmem:[%s2 + $0x128] sm:$0xff]
  %v378 = vld [vmem:[%s2 + $0x130] sm:$0xff]
  %v379 = vld [vmem:[%s2 + $0x138] sm:$0xff]
  %v380 = vld [vmem:[%s2 + $0x140] sm:$0xff]
  %v381 = vld [vmem:[%s2 + $0x148] sm:$0xff]
  %v382 = vld [vmem:[%s2 + $0x150] sm:$0xff]
  %v383 = vld [vmem:[%s2 + $0x158] sm:$0xff]
  %v384 = vld [vmem:[%s2 + $0x160] sm:$0xff]
  %v385 = vld [vmem:[%s2 + $0x168] sm:$0xff]
  %v386 = vld [vmem:[%s2 + $0x170] sm:$0xff]
  %v387 = vld [vmem:[%s2 + $0x178] sm:$0xff]
  %388 = vmatprep.subr.mxu0 %v386
  %389 = vmatpush1.msra.mxu0 %v385
  %390 = vmatprep.subr.mxu0 %v383
  %391 = vmatpush1.msra.mxu0 %v382
  %392 = vmatprep.subr.mxu0 %v380
  %393 = vmatpush1.msra.mxu0 %v379
  %394 = vmatprep.subr.mxu0 %v377
  %395 = vmatpush1.msra.mxu0 %v376
  %396 = vmatprep.subr.mxu0 %v374
  %397 = vmatpush1.msra.mxu0 %v373
  %398 = vmatprep.subr.mxu0 %v371
  %399 = vmatpush1.msra.mxu0 %v370
  %400 = vmatprep.subr.mxu0 %v368
  %401 = vmatpush1.msra.mxu0 %v367
  %402 = vmatprep.subr.mxu0 %v365
  %403 = vmatpush1.msra.mxu0 %v364
  %404 = vmatprep.subr.mxu0 %v362
  %405 = vmatpush1.msra.mxu0 %v361
  %406 = vmatprep.subr.mxu0 %v359
  %407 = vmatpush1.msra.mxu0 %v358
  %408 = vmatprep.subr.mxu0 %v356
  %409 = vmatpush1.msra.mxu0 %v355
  %410 = vmatprep.subr.mxu0 %v353
  %411 = vmatpush1.msra.mxu0 %v352
  %412 = vmatprep.subr.mxu0 %v350
  %413 = vmatpush1.msra.mxu0 %v349
  %414 = vmatprep.subr.mxu0 %v347
  %415 = vmatpush1.msra.mxu0 %v346
  %416 = vmatprep.subr.mxu0 %v344
  %417 = vmatpush1.msra.mxu0 %v343
  %418 = vmatprep.subr.mxu0 %v341
  %419 = vmatpush1.msra.mxu0 %v340
  %420 = vmatprep.subr.mxu0 0.0
  %421 = vmatpush2.msra.mxu0 0.0
  %422 = vmatprep.subr.mxu0 0.0
  %423 = vmatpush2.msra.mxu0 0.0
  %424 = vmatprep.subr.mxu0 0.0
  %425 = vmatpush2.msra.mxu0 0.0
  %426 = vmatprep.subr.mxu0 0.0
  %427 = vmatpush2.msra.mxu0 0.0
  %428 = vmatprep.subr.mxu0 0.0
  %429 = vmatpush2.msra.mxu0 0.0
  %430 = vmatprep.subr.mxu0 0.0
  %431 = vmatpush2.msra.mxu0 0.0
  %432 = vmatprep.subr.mxu0 0.0
  %433 = vmatpush2.msra.mxu0 0.0
  %434 = vmatprep.subr.mxu0 0.0
  %435 = vmatpush2.msra.mxu0 0.0
  %436 = vmatprep.subr.mxu0 0.0
  %437 = vmatpush2.msra.mxu0 0.0
  %438 = vmatprep.subr.mxu0 0.0
  %439 = vmatpush2.msra.mxu0 0.0
  %440 = vmatprep.subr.mxu0 0.0
  %441 = vmatpush2.msra.mxu0 0.0
  %442 = vmatprep.subr.mxu0 0.0
  %443 = vmatpush2.msra.mxu0 0.0
  %444 = vmatprep.subr.mxu0 0.0
  %445 = vmatpush2.msra.mxu0 0.0
  %446 = vmatprep.subr.mxu0 0.0
  %447 = vmatpush2.msra.mxu0 0.0
  %448 = vmatprep.subr.mxu0 0.0
  %449 = vmatpush2.msra.mxu0 0.0
  %450 = vmatprep.subr.mxu0 0.0
  %451 = vmatpush2.msra.mxu0 0.0
  %452 = vmatprep.mubr.f32.mxu0 0.0
  %453 = vmatmul.mubr.f32.gmra.mxu0 %v336
  %v454 = vpop.f32.mrf.mxu0
  %v455 = vadd.f32 0.0, %v454
  %v456 = vpop.f32.mrf.mxu0
  %v457 = vadd.f32 0.0, %v456
  %458 = vdwg.mxu0
  %459 = vmatprep.subr.mxu0 0.0
  %460 = vmatpush1.msra.mxu0 %v387
  %461 = vmatprep.subr.mxu0 0.0
  %462 = vmatpush1.msra.mxu0 %v384
  %463 = vmatprep.subr.mxu0 0.0
  %464 = vmatpush1.msra.mxu0 %v381
  %465 = vmatprep.subr.mxu0 0.0
  %466 = vmatpush1.msra.mxu0 %v378
  %467 = vmatprep.subr.mxu0 0.0
  %468 = vmatpush1.msra.mxu0 %v375
  %469 = vmatprep.subr.mxu0 0.0
  %470 = vmatpush1.msra.mxu0 %v372
  %471 = vmatprep.subr.mxu0 0.0
  %472 = vmatpush1.msra.mxu0 %v369
  %473 = vmatprep.subr.mxu0 0.0
  %474 = vmatpush1.msra.mxu0 %v366
  %475 = vmatprep.subr.mxu0 0.0
  %476 = vmatpush1.msra.mxu0 %v363
  %477 = vmatprep.subr.mxu0 0.0
  %478 = vmatpush1.msra.mxu0 %v360
  %479 = vmatprep.subr.mxu0 0.0
  %480 = vmatpush1.msra.mxu0 %v357
  %481 = vmatprep.subr.mxu0 0.0
  %482 = vmatpush1.msra.mxu0 %v354
  %483 = vmatprep.subr.mxu0 0.0
  %484 = vmatpush1.msra.mxu0 %v351
  %485 = vmatprep.subr.mxu0 0.0
  %486 = vmatpush1.msra.mxu0 %v348
  %487 = vmatprep.subr.mxu0 0.0
  %488 = vmatpush1.msra.mxu0 %v345
  %489 = vmatprep.subr.mxu0 0.0
  %490 = vmatpush1.msra.mxu0 %v342
  %491 = vmatprep.subr.mxu0 0.0
  %492 = vmatpush2.msra.mxu0 0.0
  %493 = vmatprep.subr.mxu0 0.0
  %494 = vmatpush2.msra.mxu0 0.0
  %495 = vmatprep.subr.mxu0 0.0
  %496 = vmatpush2.msra.mxu0 0.0
  %497 = vmatprep.subr.mxu0 0.0
  %498 = vmatpush2.msra.mxu0 0.0
  %499 = vmatprep.subr.mxu0 0.0
  %500 = vmatpush2.msra.mxu0 0.0
  %501 = vmatprep.subr.mxu0 0.0
  %502 = vmatpush2.msra.mxu0 0.0
  %503 = vmatprep.subr.mxu0 0.0
  %504 = vmatpush2.msra.mxu0 0.0
  %505 = vmatprep.subr.mxu0 0.0
  %506 = vmatpush2.msra.mxu0 0.0
  %507 = vmatprep.subr.mxu0 0.0
  %508 = vmatpush2.msra.mxu0 0.0
  %509 = vmatprep.subr.mxu0 0.0
  %510 = vmatpush2.msra.mxu0 0.0
  %511 = vmatprep.subr.mxu0 0.0
  %512 = vmatpush2.msra.mxu0 0.0
  %513 = vmatprep.subr.mxu0 0.0
  %514 = vmatpush2.msra.mxu0 0.0
  %515 = vmatprep.subr.mxu0 0.0
  %516 = vmatpush2.msra.mxu0 0.0
  %517 = vmatprep.subr.mxu0 0.0
  %518 = vmatpush2.msra.mxu0 0.0
  %519 = vmatprep.subr.mxu0 0.0
  %520 = vmatpush2.msra.mxu0 0.0
  %521 = vmatprep.subr.mxu0 0.0
  %522 = vmatpush2.msra.mxu0 0.0
  %523 = vmatprep.mubr.f32.mxu0 0.0
  %524 = vmatmul.mubr.f32.gmra.mxu0 %v336
  %v525 = vpop.f32.mrf.mxu0
  %v526 = vadd.f32 0.0, %v525
  %v527 = vpop.f32.mrf.mxu0
  %528 = vdwg.mxu0
  %v529 = vadd.f32 %v337, %v455
  %v530 = vxor.u32 %v529, 2147483648
  %v531 = vmul.f32 %v530, 1.442695
  %v532 = vpow.pop %v531
  %v533 = vadd.f32 %v532, 1.0
  %v534 = vrcp.pop %v533
  %v535 = vmul.f32 1.0, %v534
  %v536 = vadd.f32 %v338, %v457
  %v537 = vxor.u32 %v536, 2147483648
  %v538 = vmul.f32 %v537, 1.442695
  %v539 = vpow.pop %v538
  %v540 = vadd.f32 %v539, 1.0
  %v541 = vrcp.pop %v540
  %v542 = vmul.f32 1.0, %v541
  %v543 = vadd.f32 %v526, %v334
  %v544 = vmul.f32 %v535, %v543
  %v545 = vadd.f32 %v339, %v544
  %v546 = vtanh.pop %v545
  %v547 = vsub.f32 1.0, %v542
  %v548 = vmul.f32 %v547, %v546
  %v549 = vmul.f32 %v542, %v336
  %v550 = vadd.f32 %v548, %v549
  %551 = vst [vmem:[%s5] sm:$0xff] %v550
  %s552 = scalar_lea.vmem [#allocation3], 24
  %v553 = vld [vmem:[%s552] sm:$0xff]
  %v554 = vld [vmem:[%s552 + $0x8] sm:$0xff]
  %v555 = vld [vmem:[%s552 + $0x10] sm:$0xff]
  %v556 = vld [vmem:[%s2] sm:$0xff]
  %v557 = vld [vmem:[%s2 + $0x8] sm:$0xff]
  %v558 = vld [vmem:[%s2 + $0x10] sm:$0xff]
  %v559 = vld [vmem:[%s2 + $0x18] sm:$0xff]
  %v560 = vld [vmem:[%s2 + $0x20] sm:$0xff]
  %v561 = vld [vmem:[%s2 + $0x28] sm:$0xff]
  %v562 = vld [vmem:[%s2 + $0x30] sm:$0xff]
  %v563 = vld [vmem:[%s2 + $0x38] sm:$0xff]
  %v564 = vld [vmem:[%s2 + $0x40] sm:$0xff]
  %v565 = vld [vmem:[%s2 + $0x48] sm:$0xff]
  %v566 = vld [vmem:[%s2 + $0x50] sm:$0xff]
  %v567 = vld [vmem:[%s2 + $0x58] sm:$0xff]
  %v568 = vld [vmem:[%s2 + $0x60] sm:$0xff]
  %v569 = vld [vmem:[%s2 + $0x68] sm:$0xff]
  %v570 = vld [vmem:[%s2 + $0x70] sm:$0xff]
  %v571 = vld [vmem:[%s2 + $0x78] sm:$0xff]
  %v572 = vld [vmem:[%s2 + $0x80] sm:$0xff]
  %v573 = vld [vmem:[%s2 + $0x88] sm:$0xff]
  %v574 = vld [vmem:[%s2 + $0x90] sm:$0xff]
  %v575 = vld [vmem:[%s2 + $0x98] sm:$0xff]
  %v576 = vld [vmem:[%s2 + $0xa0] sm:$0xff]
  %v577 = vld [vmem:[%s2 + $0xa8] sm:$0xff]
  %v578 = vld [vmem:[%s2 + $0xb0] sm:$0xff]
  %v579 = vld [vmem:[%s2 + $0xb8] sm:$0xff]
  %v580 = vld [vmem:[%s2 + $0xc0] sm:$0xff]
  %v581 = vld [vmem:[%s2 + $0xc8] sm:$0xff]
  %v582 = vld [vmem:[%s2 + $0xd0] sm:$0xff]
  %v583 = vld [vmem:[%s2 + $0xd8] sm:$0xff]
  %v584 = vld [vmem:[%s2 + $0xe0] sm:$0xff]
  %v585 = vld [vmem:[%s2 + $0xe8] sm:$0xff]
  %v586 = vld [vmem:[%s2 + $0xf0] sm:$0xff]
  %v587 = vld [vmem:[%s2 + $0xf8] sm:$0xff]
  %v588 = vld [vmem:[%s2 + $0x100] sm:$0xff]
  %v589 = vld [vmem:[%s2 + $0x108] sm:$0xff]
  %v590 = vld [vmem:[%s2 + $0x110] sm:$0xff]
  %v591 = vld [vmem:[%s2 + $0x118] sm:$0xff]
  %v592 = vld [vmem:[%s2 + $0x120] sm:$0xff]
  %v593 = vld [vmem:[%s2 + $0x128] sm:$0xff]
  %v594 = vld [vmem:[%s2 + $0x130] sm:$0xff]
  %v595 = vld [vmem:[%s2 + $0x138] sm:$0xff]
  %v596 = vld [vmem:[%s2 + $0x140] sm:$0xff]
  %v597 = vld [vmem:[%s2 + $0x148] sm:$0xff]
  %v598 = vld [vmem:[%s2 + $0x150] sm:$0xff]
  %v599 = vld [vmem:[%s2 + $0x158] sm:$0xff]
  %v600 = vld [vmem:[%s2 + $0x160] sm:$0xff]
  %v601 = vld [vmem:[%s2 + $0x168] sm:$0xff]
  %v602 = vld [vmem:[%s2 + $0x170] sm:$0xff]
  %v603 = vld [vmem:[%s2 + $0x178] sm:$0xff]
  %604 = vmatprep.subr.mxu0 %v602
  %605 = vmatpush1.msra.mxu0 %v601
  %606 = vmatprep.subr.mxu0 %v599
  %607 = vmatpush1.msra.mxu0 %v598
  %608 = vmatprep.subr.mxu0 %v596
  %609 = vmatpush1.msra.mxu0 %v595
  %610 = vmatprep.subr.mxu0 %v593
  %611 = vmatpush1.msra.mxu0 %v592
  %612 = vmatprep.subr.mxu0 %v590
  %613 = vmatpush1.msra.mxu0 %v589
  %614 = vmatprep.subr.mxu0 %v587
  %615 = vmatpush1.msra.mxu0 %v586
  %616 = vmatprep.subr.mxu0 %v584
  %617 = vmatpush1.msra.mxu0 %v583
  %618 = vmatprep.subr.mxu0 %v581
  %619 = vmatpush1.msra.mxu0 %v580
  %620 = vmatprep.subr.mxu0 %v578
  %621 = vmatpush1.msra.mxu0 %v577
  %622 = vmatprep.subr.mxu0 %v575
  %623 = vmatpush1.msra.mxu0 %v574
  %624 = vmatprep.subr.mxu0 %v572
  %625 = vmatpush1.msra.mxu0 %v571
  %626 = vmatprep.subr.mxu0 %v569
  %627 = vmatpush1.msra.mxu0 %v568
  %628 = vmatprep.subr.mxu0 %v566
  %629 = vmatpush1.msra.mxu0 %v565
  %630 = vmatprep.subr.mxu0 %v563
  %631 = vmatpush1.msra.mxu0 %v562
  %632 = vmatprep.subr.mxu0 %v560
  %633 = vmatpush1.msra.mxu0 %v559
  %634 = vmatprep.subr.mxu0 %v557
  %635 = vmatpush1.msra.mxu0 %v556
  %636 = vmatprep.subr.mxu0 0.0
  %637 = vmatpush2.msra.mxu0 0.0
  %638 = vmatprep.subr.mxu0 0.0
  %639 = vmatpush2.msra.mxu0 0.0
  %640 = vmatprep.subr.mxu0 0.0
  %641 = vmatpush2.msra.mxu0 0.0
  %642 = vmatprep.subr.mxu0 0.0
  %643 = vmatpush2.msra.mxu0 0.0
  %644 = vmatprep.subr.mxu0 0.0
  %645 = vmatpush2.msra.mxu0 0.0
  %646 = vmatprep.subr.mxu0 0.0
  %647 = vmatpush2.msra.mxu0 0.0
  %648 = vmatprep.subr.mxu0 0.0
  %649 = vmatpush2.msra.mxu0 0.0
  %650 = vmatprep.subr.mxu0 0.0
  %651 = vmatpush2.msra.mxu0 0.0
  %652 = vmatprep.subr.mxu0 0.0
  %653 = vmatpush2.msra.mxu0 0.0
  %654 = vmatprep.subr.mxu0 0.0
  %655 = vmatpush2.msra.mxu0 0.0
  %656 = vmatprep.subr.mxu0 0.0
  %657 = vmatpush2.msra.mxu0 0.0
  %658 = vmatprep.subr.mxu0 0.0
  %659 = vmatpush2.msra.mxu0 0.0
  %660 = vmatprep.subr.mxu0 0.0
  %661 = vmatpush2.msra.mxu0 0.0
  %662 = vmatprep.subr.mxu0 0.0
  %663 = vmatpush2.msra.mxu0 0.0
  %664 = vmatprep.subr.mxu0 0.0
  %665 = vmatpush2.msra.mxu0 0.0
  %666 = vmatprep.subr.mxu0 0.0
  %667 = vmatpush2.msra.mxu0 0.0
  %668 = vmatprep.mubr.f32.mxu0 0.0
  %669 = vmatmul.mubr.f32.gmra.mxu0 %v550
  %v670 = vpop.f32.mrf.mxu0
  %v671 = vadd.f32 0.0, %v670
  %v672 = vpop.f32.mrf.mxu0
  %v673 = vadd.f32 0.0, %v672
  %674 = vdwg.mxu0
  %675 = vmatprep.subr.mxu0 0.0
  %676 = vmatpush1.msra.mxu0 %v603
  %677 = vmatprep.subr.mxu0 0.0
  %678 = vmatpush1.msra.mxu0 %v600
  %679 = vmatprep.subr.mxu0 0.0
  %680 = vmatpush1.msra.mxu0 %v597
  %681 = vmatprep.subr.mxu0 0.0
  %682 = vmatpush1.msra.mxu0 %v594
  %683 = vmatprep.subr.mxu0 0.0
  %684 = vmatpush1.msra.mxu0 %v591
  %685 = vmatprep.subr.mxu0 0.0
  %686 = vmatpush1.msra.mxu0 %v588
  %687 = vmatprep.subr.mxu0 0.0
  %688 = vmatpush1.msra.mxu0 %v585
  %689 = vmatprep.subr.mxu0 0.0
  %690 = vmatpush1.msra.mxu0 %v582
  %691 = vmatprep.subr.mxu0 0.0
  %692 = vmatpush1.msra.mxu0 %v579
  %693 = vmatprep.subr.mxu0 0.0
  %694 = vmatpush1.msra.mxu0 %v576
  %695 = vmatprep.subr.mxu0 0.0
  %696 = vmatpush1.msra.mxu0 %v573
  %697 = vmatprep.subr.mxu0 0.0
  %698 = vmatpush1.msra.mxu0 %v570
  %699 = vmatprep.subr.mxu0 0.0
  %700 = vmatpush1.msra.mxu0 %v567
  %701 = vmatprep.subr.mxu0 0.0
  %702 = vmatpush1.msra.mxu0 %v564
  %703 = vmatprep.subr.mxu0 0.0
  %704 = vmatpush1.msra.mxu0 %v561
  %705 = vmatprep.subr.mxu0 0.0
  %706 = vmatpush1.msra.mxu0 %v558
  %707 = vmatprep.subr.mxu0 0.0
  %708 = vmatpush2.msra.mxu0 0.0
  %709 = vmatprep.subr.mxu0 0.0
  %710 = vmatpush2.msra.mxu0 0.0
  %711 = vmatprep.subr.mxu0 0.0
  %712 = vmatpush2.msra.mxu0 0.0
  %713 = vmatprep.subr.mxu0 0.0
  %714 = vmatpush2.msra.mxu0 0.0
  %715 = vmatprep.subr.mxu0 0.0
  %716 = vmatpush2.msra.mxu0 0.0
  %717 = vmatprep.subr.mxu0 0.0
  %718 = vmatpush2.msra.mxu0 0.0
  %719 = vmatprep.subr.mxu0 0.0
  %720 = vmatpush2.msra.mxu0 0.0
  %721 = vmatprep.subr.mxu0 0.0
  %722 = vmatpush2.msra.mxu0 0.0
  %723 = vmatprep.subr.mxu0 0.0
  %724 = vmatpush2.msra.mxu0 0.0
  %725 = vmatprep.subr.mxu0 0.0
  %726 = vmatpush2.msra.mxu0 0.0
  %727 = vmatprep.subr.mxu0 0.0
  %728 = vmatpush2.msra.mxu0 0.0
  %729 = vmatprep.subr.mxu0 0.0
  %730 = vmatpush2.msra.mxu0 0.0
  %731 = vmatprep.subr.mxu0 0.0
  %732 = vmatpush2.msra.mxu0 0.0
  %733 = vmatprep.subr.mxu0 0.0
  %734 = vmatpush2.msra.mxu0 0.0
  %735 = vmatprep.subr.mxu0 0.0
  %736 = vmatpush2.msra.mxu0 0.0
  %737 = vmatprep.subr.mxu0 0.0
  %738 = vmatpush2.msra.mxu0 0.0
  %739 = vmatprep.mubr.f32.mxu0 0.0
  %740 = vmatmul.mubr.f32.gmra.mxu0 %v550
  %v741 = vpop.f32.mrf.mxu0
  %v742 = vadd.f32 0.0, %v741
  %v743 = vpop.f32.mrf.mxu0
  %744 = vdwg.mxu0
  %v745 = vadd.f32 %v553, %v671
  %v746 = vxor.u32 %v745, 2147483648
  %v747 = vmul.f32 %v746, 1.442695
  %v748 = vpow.pop %v747
  %v749 = vadd.f32 %v748, 1.0
  %v750 = vrcp.pop %v749
  %v751 = vmul.f32 1.0, %v750
  %v752 = vadd.f32 %v554, %v673
  %v753 = vxor.u32 %v752, 2147483648
  %v754 = vmul.f32 %v753, 1.442695
  %v755 = vpow.pop %v754
  %v756 = vadd.f32 %v755, 1.0
  %v757 = vrcp.pop %v756
  %v758 = vmul.f32 1.0, %v757
  %v759 = vadd.f32 %v742, %v334
  %v760 = vmul.f32 %v751, %v759
  %v761 = vadd.f32 %v555, %v760
  %v762 = vtanh.pop %v761
  %v763 = vsub.f32 1.0, %v758
  %v764 = vmul.f32 %v763, %v762
  %v765 = vmul.f32 %v758, %v550
  %v766 = vadd.f32 %v764, %v765
  %s767 = scalar_lea.vmem %s5, 8
  %768 = vst [vmem:[%s767] sm:$0xff] %v766
  %s769 = scalar_lea.vmem [#allocation3], 48
  %v770 = vld [vmem:[%s769] sm:$0xff]
  %v771 = vld [vmem:[%s769 + $0x8] sm:$0xff]
  %v772 = vld [vmem:[%s769 + $0x10] sm:$0xff]
  %v773 = vld [vmem:[%s2] sm:$0xff]
  %v774 = vld [vmem:[%s2 + $0x8] sm:$0xff]
  %v775 = vld [vmem:[%s2 + $0x10] sm:$0xff]
  %v776 = vld [vmem:[%s2 + $0x18] sm:$0xff]
  %v777 = vld [vmem:[%s2 + $0x20] sm:$0xff]
  %v778 = vld [vmem:[%s2 + $0x28] sm:$0xff]
  %v779 = vld [vmem:[%s2 + $0x30] sm:$0xff]
  %v780 = vld [vmem:[%s2 + $0x38] sm:$0xff]
  %v781 = vld [vmem:[%s2 + $0x40] sm:$0xff]
  %v782 = vld [vmem:[%s2 + $0x48] sm:$0xff]
  %v783 = vld [vmem:[%s2 + $0x50] sm:$0xff]
  %v784 = vld [vmem:[%s2 + $0x58] sm:$0xff]
  %v785 = vld [vmem:[%s2 + $0x60] sm:$0xff]
  %v786 = vld [vmem:[%s2 + $0x68] sm:$0xff]
  %v787 = vld [vmem:[%s2 + $0x70] sm:$0xff]
  %v788 = vld [vmem:[%s2 + $0x78] sm:$0xff]
  %v789 = vld [vmem:[%s2 + $0x80] sm:$0xff]
  %v790 = vld [vmem:[%s2 + $0x88] sm:$0xff]
  %v791 = vld [vmem:[%s2 + $0x90] sm:$0xff]
  %v792 = vld [vmem:[%s2 + $0x98] sm:$0xff]
  %v793 = vld [vmem:[%s2 + $0xa0] sm:$0xff]
  %v794 = vld [vmem:[%s2 + $0xa8] sm:$0xff]
  %v795 = vld [vmem:[%s2 + $0xb0] sm:$0xff]
  %v796 = vld [vmem:[%s2 + $0xb8] sm:$0xff]
  %v797 = vld [vmem:[%s2 + $0xc0] sm:$0xff]
  %v798 = vld [vmem:[%s2 + $0xc8] sm:$0xff]
  %v799 = vld [vmem:[%s2 + $0xd0] sm:$0xff]
  %v800 = vld [vmem:[%s2 + $0xd8] sm:$0xff]
  %v801 = vld [vmem:[%s2 + $0xe0] sm:$0xff]
  %v802 = vld [vmem:[%s2 + $0xe8] sm:$0xff]
  %v803 = vld [vmem:[%s2 + $0xf0] sm:$0xff]
  %v804 = vld [vmem:[%s2 + $0xf8] sm:$0xff]
  %v805 = vld [vmem:[%s2 + $0x100] sm:$0xff]
  %v806 = vld [vmem:[%s2 + $0x108] sm:$0xff]
  %v807 = vld [vmem:[%s2 + $0x110] sm:$0xff]
  %v808 = vld [vmem:[%s2 + $0x118] sm:$0xff]
  %v809 = vld [vmem:[%s2 + $0x120] sm:$0xff]
  %v810 = vld [vmem:[%s2 + $0x128] sm:$0xff]
  %v811 = vld [vmem:[%s2 + $0x130] sm:$0xff]
  %v812 = vld [vmem:[%s2 + $0x138] sm:$0xff]
  %v813 = vld [vmem:[%s2 + $0x140] sm:$0xff]
  %v814 = vld [vmem:[%s2 + $0x148] sm:$0xff]
  %v815 = vld [vmem:[%s2 + $0x150] sm:$0xff]
  %v816 = vld [vmem:[%s2 + $0x158] sm:$0xff]
  %v817 = vld [vmem:[%s2 + $0x160] sm:$0xff]
  %v818 = vld [vmem:[%s2 + $0x168] sm:$0xff]
  %v819 = vld [vmem:[%s2 + $0x170] sm:$0xff]
  %v820 = vld [vmem:[%s2 + $0x178] sm:$0xff]
  %821 = vmatprep.subr.mxu0 %v819
  %822 = vmatpush1.msra.mxu0 %v818
  %823 = vmatprep.subr.mxu0 %v816
  %824 = vmatpush1.msra.mxu0 %v815
  %825 = vmatprep.subr.mxu0 %v813
  %826 = vmatpush1.msra.mxu0 %v812
  %827 = vmatprep.subr.mxu0 %v810
  %828 = vmatpush1.msra.mxu0 %v809
  %829 = vmatprep.subr.mxu0 %v807
  %830 = vmatpush1.msra.mxu0 %v806
  %831 = vmatprep.subr.mxu0 %v804
  %832 = vmatpush1.msra.mxu0 %v803
  %833 = vmatprep.subr.mxu0 %v801
  %834 = vmatpush1.msra.mxu0 %v800
  %835 = vmatprep.subr.mxu0 %v798
  %836 = vmatpush1.msra.mxu0 %v797
  %837 = vmatprep.subr.mxu0 %v795
  %838 = vmatpush1.msra.mxu0 %v794
  %839 = vmatprep.subr.mxu0 %v792
  %840 = vmatpush1.msra.mxu0 %v791
  %841 = vmatprep.subr.mxu0 %v789
  %842 = vmatpush1.msra.mxu0 %v788
  %843 = vmatprep.subr.mxu0 %v786
  %844 = vmatpush1.msra.mxu0 %v785
  %845 = vmatprep.subr.mxu0 %v783
  %846 = vmatpush1.msra.mxu0 %v782
  %847 = vmatprep.subr.mxu0 %v780
  %848 = vmatpush1.msra.mxu0 %v779
  %849 = vmatprep.subr.mxu0 %v777
  %850 = vmatpush1.msra.mxu0 %v776
  %851 = vmatprep.subr.mxu0 %v774
  %852 = vmatpush1.msra.mxu0 %v773
  %853 = vmatprep.subr.mxu0 0.0
  %854 = vmatpush2.msra.mxu0 0.0
  %855 = vmatprep.subr.mxu0 0.0
  %856 = vmatpush2.msra.mxu0 0.0
  %857 = vmatprep.subr.mxu0 0.0
  %858 = vmatpush2.msra.mxu0 0.0
  %859 = vmatprep.subr.mxu0 0.0
  %860 = vmatpush2.msra.mxu0 0.0
  %861 = vmatprep.subr.mxu0 0.0
  %862 = vmatpush2.msra.mxu0 0.0
  %863 = vmatprep.subr.mxu0 0.0
  %864 = vmatpush2.msra.mxu0 0.0
  %865 = vmatprep.subr.mxu0 0.0
  %866 = vmatpush2.msra.mxu0 0.0
  %867 = vmatprep.subr.mxu0 0.0
  %868 = vmatpush2.msra.mxu0 0.0
  %869 = vmatprep.subr.mxu0 0.0
  %870 = vmatpush2.msra.mxu0 0.0
  %871 = vmatprep.subr.mxu0 0.0
  %872 = vmatpush2.msra.mxu0 0.0
  %873 = vmatprep.subr.mxu0 0.0
  %874 = vmatpush2.msra.mxu0 0.0
  %875 = vmatprep.subr.mxu0 0.0
  %876 = vmatpush2.msra.mxu0 0.0
  %877 = vmatprep.subr.mxu0 0.0
  %878 = vmatpush2.msra.mxu0 0.0
  %879 = vmatprep.subr.mxu0 0.0
  %880 = vmatpush2.msra.mxu0 0.0
  %881 = vmatprep.subr.mxu0 0.0
  %882 = vmatpush2.msra.mxu0 0.0
  %883 = vmatprep.subr.mxu0 0.0
  %884 = vmatpush2.msra.mxu0 0.0
  %885 = vmatprep.mubr.f32.mxu0 0.0
  %886 = vmatmul.mubr.f32.gmra.mxu0 %v766
  %v887 = vpop.f32.mrf.mxu0
  %v888 = vadd.f32 0.0, %v887
  %v889 = vpop.f32.mrf.mxu0
  %v890 = vadd.f32 0.0, %v889
  %891 = vdwg.mxu0
  %892 = vmatprep.subr.mxu0 0.0
  %893 = vmatpush1.msra.mxu0 %v820
  %894 = vmatprep.subr.mxu0 0.0
  %895 = vmatpush1.msra.mxu0 %v817
  %896 = vmatprep.subr.mxu0 0.0
  %897 = vmatpush1.msra.mxu0 %v814
  %898 = vmatprep.subr.mxu0 0.0
  %899 = vmatpush1.msra.mxu0 %v811
  %900 = vmatprep.subr.mxu0 0.0
  %901 = vmatpush1.msra.mxu0 %v808
  %902 = vmatprep.subr.mxu0 0.0
  %903 = vmatpush1.msra.mxu0 %v805
  %904 = vmatprep.subr.mxu0 0.0
  %905 = vmatpush1.msra.mxu0 %v802
  %906 = vmatprep.subr.mxu0 0.0
  %907 = vmatpush1.msra.mxu0 %v799
  %908 = vmatprep.subr.mxu0 0.0
  %909 = vmatpush1.msra.mxu0 %v796
  %910 = vmatprep.subr.mxu0 0.0
  %911 = vmatpush1.msra.mxu0 %v793
  %912 = vmatprep.subr.mxu0 0.0
  %913 = vmatpush1.msra.mxu0 %v790
  %914 = vmatprep.subr.mxu0 0.0
  %915 = vmatpush1.msra.mxu0 %v787
  %916 = vmatprep.subr.mxu0 0.0
  %917 = vmatpush1.msra.mxu0 %v784
  %918 = vmatprep.subr.mxu0 0.0
  %919 = vmatpush1.msra.mxu0 %v781
  %920 = vmatprep.subr.mxu0 0.0
  %921 = vmatpush1.msra.mxu0 %v778
  %922 = vmatprep.subr.mxu0 0.0
  %923 = vmatpush1.msra.mxu0 %v775
  %924 = vmatprep.subr.mxu0 0.0
  %925 = vmatpush2.msra.mxu0 0.0
  %926 = vmatprep.subr.mxu0 0.0
  %927 = vmatpush2.msra.mxu0 0.0
  %928 = vmatprep.subr.mxu0 0.0
  %929 = vmatpush2.msra.mxu0 0.0
  %930 = vmatprep.subr.mxu0 0.0
  %931 = vmatpush2.msra.mxu0 0.0
  %932 = vmatprep.subr.mxu0 0.0
  %933 = vmatpush2.msra.mxu0 0.0
  %934 = vmatprep.subr.mxu0 0.0
  %935 = vmatpush2.msra.mxu0 0.0
  %936 = vmatprep.subr.mxu0 0.0
  %937 = vmatpush2.msra.mxu0 0.0
  %938 = vmatprep.subr.mxu0 0.0
  %939 = vmatpush2.msra.mxu0 0.0
  %940 = vmatprep.subr.mxu0 0.0
  %941 = vmatpush2.msra.mxu0 0.0
  %942 = vmatprep.subr.mxu0 0.0
  %943 = vmatpush2.msra.mxu0 0.0
  %944 = vmatprep.subr.mxu0 0.0
  %945 = vmatpush2.msra.mxu0 0.0
  %946 = vmatprep.subr.mxu0 0.0
  %947 = vmatpush2.msra.mxu0 0.0
  %948 = vmatprep.subr.mxu0 0.0
  %949 = vmatpush2.msra.mxu0 0.0
  %950 = vmatprep.subr.mxu0 0.0
  %951 = vmatpush2.msra.mxu0 0.0
  %952 = vmatprep.subr.mxu0 0.0
  %953 = vmatpush2.msra.mxu0 0.0
  %954 = vmatprep.subr.mxu0 0.0
  %955 = vmatpush2.msra.mxu0 0.0
  %956 = vmatprep.mubr.f32.mxu0 0.0
  %957 = vmatmul.mubr.f32.gmra.mxu0 %v766
  %v958 = vpop.f32.mrf.mxu0
  %v959 = vadd.f32 0.0, %v958
  %v960 = vpop.f32.mrf.mxu0
  %961 = vdwg.mxu0
  %v962 = vadd.f32 %v770, %v888
  %v963 = vxor.u32 %v962, 2147483648
  %v964 = vmul.f32 %v963, 1.442695
  %v965 = vpow.pop %v964
  %v966 = vadd.f32 %v965, 1.0
  %v967 = vrcp.pop %v966
  %v968 = vmul.f32 1.0, %v967
  %v969 = vadd.f32 %v771, %v890
  %v970 = vxor.u32 %v969, 2147483648
  %v971 = vmul.f32 %v970, 1.442695
  %v972 = vpow.pop %v971
  %v973 = vadd.f32 %v972, 1.0
  %v974 = vrcp.pop %v973
  %v975 = vmul.f32 1.0, %v974
  %v976 = vadd.f32 %v959, %v334
  %v977 = vmul.f32 %v968, %v976
  %v978 = vadd.f32 %v772, %v977
  %v979 = vtanh.pop %v978
  %v980 = vsub.f32 1.0, %v975
  %v981 = vmul.f32 %v980, %v979
  %v982 = vmul.f32 %v975, %v766
  %v983 = vadd.f32 %v981, %v982
  %s984 = scalar_lea.vmem %s5, 16
  %985 = vst [vmem:[%s984] sm:$0xff] %v983
  %s986 = scalar_lea.vmem [#allocation3], 72
  %v987 = vld [vmem:[%s986] sm:$0xff]
  %v988 = vld [vmem:[%s986 + $0x8] sm:$0xff]
  %v989 = vld [vmem:[%s986 + $0x10] sm:$0xff]
  %v990 = vld [vmem:[%s2] sm:$0xff]
  %v991 = vld [vmem:[%s2 + $0x8] sm:$0xff]
  %v992 = vld [vmem:[%s2 + $0x10] sm:$0xff]
  %v993 = vld [vmem:[%s2 + $0x18] sm:$0xff]
  %v994 = vld [vmem:[%s2 + $0x20] sm:$0xff]
  %v995 = vld [vmem:[%s2 + $0x28] sm:$0xff]
  %v996 = vld [vmem:[%s2 + $0x30] sm:$0xff]
  %v997 = vld [vmem:[%s2 + $0x38] sm:$0xff]
  %v998 = vld [vmem:[%s2 + $0x40] sm:$0xff]
  %v999 = vld [vmem:[%s2 + $0x48] sm:$0xff]
  %v1000 = vld [vmem:[%s2 + $0x50] sm:$0xff]
  %v1001 = vld [vmem:[%s2 + $0x58] sm:$0xff]
  %v1002 = vld [vmem:[%s2 + $0x60] sm:$0xff]
  %v1003 = vld [vmem:[%s2 + $0x68] sm:$0xff]
  %v1004 = vld [vmem:[%s2 + $0x70] sm:$0xff]
  %v1005 = vld [vmem:[%s2 + $0x78] sm:$0xff]
  %v1006 = vld [vmem:[%s2 + $0x80] sm:$0xff]
  %v1007 = vld [vmem:[%s2 + $0x88] sm:$0xff]
  %v1008 = vld [vmem:[%s2 + $0x90] sm:$0xff]
  %v1009 = vld [vmem:[%s2 + $0x98] sm:$0xff]
  %v1010 = vld [vmem:[%s2 + $0xa0] sm:$0xff]
  %v1011 = vld [vmem:[%s2 + $0xa8] sm:$0xff]
  %v1012 = vld [vmem:[%s2 + $0xb0] sm:$0xff]
  %v1013 = vld [vmem:[%s2 + $0xb8] sm:$0xff]
  %v1014 = vld [vmem:[%s2 + $0xc0] sm:$0xff]
  %v1015 = vld [vmem:[%s2 + $0xc8] sm:$0xff]
  %v1016 = vld [vmem:[%s2 + $0xd0] sm:$0xff]
  %v1017 = vld [vmem:[%s2 + $0xd8] sm:$0xff]
  %v1018 = vld [vmem:[%s2 + $0xe0] sm:$0xff]
  %v1019 = vld [vmem:[%s2 + $0xe8] sm:$0xff]
  %v1020 = vld [vmem:[%s2 + $0xf0] sm:$0xff]
  %v1021 = vld [vmem:[%s2 + $0xf8] sm:$0xff]
  %v1022 = vld [vmem:[%s2 + $0x100] sm:$0xff]
  %v1023 = vld [vmem:[%s2 + $0x108] sm:$0xff]
  %v1024 = vld [vmem:[%s2 + $0x110] sm:$0xff]
  %v1025 = vld [vmem:[%s2 + $0x118] sm:$0xff]
  %v1026 = vld [vmem:[%s2 + $0x120] sm:$0xff]
  %v1027 = vld [vmem:[%s2 + $0x128] sm:$0xff]
  %v1028 = vld [vmem:[%s2 + $0x130] sm:$0xff]
  %v1029 = vld [vmem:[%s2 + $0x138] sm:$0xff]
  %v1030 = vld [vmem:[%s2 + $0x140] sm:$0xff]
  %v1031 = vld [vmem:[%s2 + $0x148] sm:$0xff]
  %v1032 = vld [vmem:[%s2 + $0x150] sm:$0xff]
  %v1033 = vld [vmem:[%s2 + $0x158] sm:$0xff]
  %v1034 = vld [vmem:[%s2 + $0x160] sm:$0xff]
  %v1035 = vld [vmem:[%s2 + $0x168] sm:$0xff]
  %v1036 = vld [vmem:[%s2 + $0x170] sm:$0xff]
  %v1037 = vld [vmem:[%s2 + $0x178] sm:$0xff]
  %1038 = vmatprep.subr.mxu0 %v1036
  %1039 = vmatpush1.msra.mxu0 %v1035
  %1040 = vmatprep.subr.mxu0 %v1033
  %1041 = vmatpush1.msra.mxu0 %v1032
  %1042 = vmatprep.subr.mxu0 %v1030
  %1043 = vmatpush1.msra.mxu0 %v1029
  %1044 = vmatprep.subr.mxu0 %v1027
  %1045 = vmatpush1.msra.mxu0 %v1026
  %1046 = vmatprep.subr.mxu0 %v1024
  %1047 = vmatpush1.msra.mxu0 %v1023
  %1048 = vmatprep.subr.mxu0 %v1021
  %1049 = vmatpush1.msra.mxu0 %v1020
  %1050 = vmatprep.subr.mxu0 %v1018
  %1051 = vmatpush1.msra.mxu0 %v1017
  %1052 = vmatprep.subr.mxu0 %v1015
  %1053 = vmatpush1.msra.mxu0 %v1014
  %1054 = vmatprep.subr.mxu0 %v1012
  %1055 = vmatpush1.msra.mxu0 %v1011
  %1056 = vmatprep.subr.mxu0 %v1009
  %1057 = vmatpush1.msra.mxu0 %v1008
  %1058 = vmatprep.subr.mxu0 %v1006
  %1059 = vmatpush1.msra.mxu0 %v1005
  %1060 = vmatprep.subr.mxu0 %v1003
  %1061 = vmatpush1.msra.mxu0 %v1002
  %1062 = vmatprep.subr.mxu0 %v1000
  %1063 = vmatpush1.msra.mxu0 %v999
  %1064 = vmatprep.subr.mxu0 %v997
  %1065 = vmatpush1.msra.mxu0 %v996
  %1066 = vmatprep.subr.mxu0 %v994
  %1067 = vmatpush1.msra.mxu0 %v993
  %1068 = vmatprep.subr.mxu0 %v991
  %1069 = vmatpush1.msra.mxu0 %v990
  %1070 = vmatprep.subr.mxu0 0.0
  %1071 = vmatpush2.msra.mxu0 0.0
  %1072 = vmatprep.subr.mxu0 0.0
  %1073 = vmatpush2.msra.mxu0 0.0
  %1074 = vmatprep.subr.mxu0 0.0
  %1075 = vmatpush2.msra.mxu0 0.0
  %1076 = vmatprep.subr.mxu0 0.0
  %1077 = vmatpush2.msra.mxu0 0.0
  %1078 = vmatprep.subr.mxu0 0.0
  %1079 = vmatpush2.msra.mxu0 0.0
  %1080 = vmatprep.subr.mxu0 0.0
  %1081 = vmatpush2.msra.mxu0 0.0
  %1082 = vmatprep.subr.mxu0 0.0
  %1083 = vmatpush2.msra.mxu0 0.0
  %1084 = vmatprep.subr.mxu0 0.0
  %1085 = vmatpush2.msra.mxu0 0.0
  %1086 = vmatprep.subr.mxu0 0.0
  %1087 = vmatpush2.msra.mxu0 0.0
  %1088 = vmatprep.subr.mxu0 0.0
  %1089 = vmatpush2.msra.mxu0 0.0
  %1090 = vmatprep.subr.mxu0 0.0
  %1091 = vmatpush2.msra.mxu0 0.0
  %1092 = vmatprep.subr.mxu0 0.0
  %1093 = vmatpush2.msra.mxu0 0.0
  %1094 = vmatprep.subr.mxu0 0.0
  %1095 = vmatpush2.msra.mxu0 0.0
  %1096 = vmatprep.subr.mxu0 0.0
  %1097 = vmatpush2.msra.mxu0 0.0
  %1098 = vmatprep.subr.mxu0 0.0
  %1099 = vmatpush2.msra.mxu0 0.0
  %1100 = vmatprep.subr.mxu0 0.0
  %1101 = vmatpush2.msra.mxu0 0.0
  %1102 = vmatprep.mubr.f32.mxu0 0.0
  %1103 = vmatmul.mubr.f32.gmra.mxu0 %v983
  %v1104 = vpop.f32.mrf.mxu0
  %v1105 = vadd.f32 0.0, %v1104
  %v1106 = vpop.f32.mrf.mxu0
  %v1107 = vadd.f32 0.0, %v1106
  %1108 = vdwg.mxu0
  %1109 = vmatprep.subr.mxu0 0.0
  %1110 = vmatpush1.msra.mxu0 %v1037
  %1111 = vmatprep.subr.mxu0 0.0
  %1112 = vmatpush1.msra.mxu0 %v1034
  %1113 = vmatprep.subr.mxu0 0.0
  %1114 = vmatpush1.msra.mxu0 %v1031
  %1115 = vmatprep.subr.mxu0 0.0
  %1116 = vmatpush1.msra.mxu0 %v1028
  %1117 = vmatprep.subr.mxu0 0.0
  %1118 = vmatpush1.msra.mxu0 %v1025
  %1119 = vmatprep.subr.mxu0 0.0
  %1120 = vmatpush1.msra.mxu0 %v1022
  %1121 = vmatprep.subr.mxu0 0.0
  %1122 = vmatpush1.msra.mxu0 %v1019
  %1123 = vmatprep.subr.mxu0 0.0
  %1124 = vmatpush1.msra.mxu0 %v1016
  %1125 = vmatprep.subr.mxu0 0.0
  %1126 = vmatpush1.msra.mxu0 %v1013
  %1127 = vmatprep.subr.mxu0 0.0
  %1128 = vmatpush1.msra.mxu0 %v1010
  %1129 = vmatprep.subr.mxu0 0.0
  %1130 = vmatpush1.msra.mxu0 %v1007
  %1131 = vmatprep.subr.mxu0 0.0
  %1132 = vmatpush1.msra.mxu0 %v1004
  %1133 = vmatprep.subr.mxu0 0.0
  %1134 = vmatpush1.msra.mxu0 %v1001
  %1135 = vmatprep.subr.mxu0 0.0
  %1136 = vmatpush1.msra.mxu0 %v998
  %1137 = vmatprep.subr.mxu0 0.0
  %1138 = vmatpush1.msra.mxu0 %v995
  %1139 = vmatprep.subr.mxu0 0.0
  %1140 = vmatpush1.msra.mxu0 %v992
  %1141 = vmatprep.subr.mxu0 0.0
  %1142 = vmatpush2.msra.mxu0 0.0
  %1143 = vmatprep.subr.mxu0 0.0
  %1144 = vmatpush2.msra.mxu0 0.0
  %1145 = vmatprep.subr.mxu0 0.0
  %1146 = vmatpush2.msra.mxu0 0.0
  %1147 = vmatprep.subr.mxu0 0.0
  %1148 = vmatpush2.msra.mxu0 0.0
  %1149 = vmatprep.subr.mxu0 0.0
  %1150 = vmatpush2.msra.mxu0 0.0
  %1151 = vmatprep.subr.mxu0 0.0
  %1152 = vmatpush2.msra.mxu0 0.0
  %1153 = vmatprep.subr.mxu0 0.0
  %1154 = vmatpush2.msra.mxu0 0.0
  %1155 = vmatprep.subr.mxu0 0.0
  %1156 = vmatpush2.msra.mxu0 0.0
  %1157 = vmatprep.subr.mxu0 0.0
  %1158 = vmatpush2.msra.mxu0 0.0
  %1159 = vmatprep.subr.mxu0 0.0
  %1160 = vmatpush2.msra.mxu0 0.0
  %1161 = vmatprep.subr.mxu0 0.0
  %1162 = vmatpush2.msra.mxu0 0.0
  %1163 = vmatprep.subr.mxu0 0.0
  %1164 = vmatpush2.msra.mxu0 0.0
  %1165 = vmatprep.subr.mxu0 0.0
  %1166 = vmatpush2.msra.mxu0 0.0
  %1167 = vmatprep.subr.mxu0 0.0
  %1168 = vmatpush2.msra.mxu0 0.0
  %1169 = vmatprep.subr.mxu0 0.0
  %1170 = vmatpush2.msra.mxu0 0.0
  %1171 = vmatprep.subr.mxu0 0.0
  %1172 = vmatpush2.msra.mxu0 0.0
  %1173 = vmatprep.mubr.f32.mxu0 0.0
  %1174 = vmatmul.mubr.f32.gmra.mxu0 %v983
  %v1175 = vpop.f32.mrf.mxu0
  %v1176 = vadd.f32 0.0, %v1175
  %v1177 = vpop.f32.mrf.mxu0
  %1178 = vdwg.mxu0
  %v1179 = vadd.f32 %v987, %v1105
  %v1180 = vxor.u32 %v1179, 2147483648
  %v1181 = vmul.f32 %v1180, 1.442695
  %v1182 = vpow.pop %v1181
  %v1183 = vadd.f32 %v1182, 1.0
  %v1184 = vrcp.pop %v1183
  %v1185 = vmul.f32 1.0, %v1184
  %v1186 = vadd.f32 %v988, %v1107
  %v1187 = vxor.u32 %v1186, 2147483648
  %v1188 = vmul.f32 %v1187, 1.442695
  %v1189 = vpow.pop %v1188
  %v1190 = vadd.f32 %v1189, 1.0
  %v1191 = vrcp.pop %v1190
  %v1192 = vmul.f32 1.0, %v1191
  %v1193 = vadd.f32 %v1176, %v334
  %v1194 = vmul.f32 %v1185, %v1193
  %v1195 = vadd.f32 %v989, %v1194
  %v1196 = vtanh.pop %v1195
  %v1197 = vsub.f32 1.0, %v1192
  %v1198 = vmul.f32 %v1197, %v1196
  %v1199 = vmul.f32 %v1192, %v983
  %v1200 = vadd.f32 %v1198, %v1199
  %s1201 = scalar_lea.vmem %s5, 24
  %1202 = vst [vmem:[%s1201] sm:$0xff] %v1200
  %s1203 = scalar_lea.vmem [#allocation3], 96
  %v1204 = vld [vmem:[%s1203] sm:$0xff]
  %v1205 = vld [vmem:[%s1203 + $0x8] sm:$0xff]
  %v1206 = vld [vmem:[%s1203 + $0x10] sm:$0xff]
  %v1207 = vld [vmem:[%s2] sm:$0xff]
  %v1208 = vld [vmem:[%s2 + $0x8] sm:$0xff]
  %v1209 = vld [vmem:[%s2 + $0x10] sm:$0xff]
  %v1210 = vld [vmem:[%s2 + $0x18] sm:$0xff]
  %v1211 = vld [vmem:[%s2 + $0x20] sm:$0xff]
  %v1212 = vld [vmem:[%s2 + $0x28] sm:$0xff]
  %v1213 = vld [vmem:[%s2 + $0x30] sm:$0xff]
  %v1214 = vld [vmem:[%s2 + $0x38] sm:$0xff]
  %v1215 = vld [vmem:[%s2 + $0x40] sm:$0xff]
  %v1216 = vld [vmem:[%s2 + $0x48] sm:$0xff]
  %v1217 = vld [vmem:[%s2 + $0x50] sm:$0xff]
  %v1218 = vld [vmem:[%s2 + $0x58] sm:$0xff]
  %v1219 = vld [vmem:[%s2 + $0x60] sm:$0xff]
  %v1220 = vld [vmem:[%s2 + $0x68] sm:$0xff]
  %v1221 = vld [vmem:[%s2 + $0x70] sm:$0xff]
  %v1222 = vld [vmem:[%s2 + $0x78] sm:$0xff]
  %v1223 = vld [vmem:[%s2 + $0x80] sm:$0xff]
  %v1224 = vld [vmem:[%s2 + $0x88] sm:$0xff]
  %v1225 = vld [vmem:[%s2 + $0x90] sm:$0xff]
  %v1226 = vld [vmem:[%s2 + $0x98] sm:$0xff]
  %v1227 = vld [vmem:[%s2 + $0xa0] sm:$0xff]
  %v1228 = vld [vmem:[%s2 + $0xa8] sm:$0xff]
  %v1229 = vld [vmem:[%s2 + $0xb0] sm:$0xff]
  %v1230 = vld [vmem:[%s2 + $0xb8] sm:$0xff]
  %v1231 = vld [vmem:[%s2 + $0xc0] sm:$0xff]
  %v1232 = vld [vmem:[%s2 + $0xc8] sm:$0xff]
  %v1233 = vld [vmem:[%s2 + $0xd0] sm:$0xff]
  %v1234 = vld [vmem:[%s2 + $0xd8] sm:$0xff]
  %v1235 = vld [vmem:[%s2 + $0xe0] sm:$0xff]
  %v1236 = vld [vmem:[%s2 + $0xe8] sm:$0xff]
  %v1237 = vld [vmem:[%s2 + $0xf0] sm:$0xff]
  %v1238 = vld [vmem:[%s2 + $0xf8] sm:$0xff]
  %v1239 = vld [vmem:[%s2 + $0x100] sm:$0xff]
  %v1240 = vld [vmem:[%s2 + $0x108] sm:$0xff]
  %v1241 = vld [vmem:[%s2 + $0x110] sm:$0xff]
  %v1242 = vld [vmem:[%s2 + $0x118] sm:$0xff]
  %v1243 = vld [vmem:[%s2 + $0x120] sm:$0xff]
  %v1244 = vld [vmem:[%s2 + $0x128] sm:$0xff]
  %v1245 = vld [vmem:[%s2 + $0x130] sm:$0xff]
  %v1246 = vld [vmem:[%s2 + $0x138] sm:$0xff]
  %v1247 = vld [vmem:[%s2 + $0x140] sm:$0xff]
  %v1248 = vld [vmem:[%s2 + $0x148] sm:$0xff]
  %v1249 = vld [vmem:[%s2 + $0x150] sm:$0xff]
  %v1250 = vld [vmem:[%s2 + $0x158] sm:$0xff]
  %v1251 = vld [vmem:[%s2 + $0x160] sm:$0xff]
  %v1252 = vld [vmem:[%s2 + $0x168] sm:$0xff]
  %v1253 = vld [vmem:[%s2 + $0x170] sm:$0xff]
  %v1254 = vld [vmem:[%s2 + $0x178] sm:$0xff]
  %1255 = vmatprep.subr.mxu0 %v1253
  %1256 = vmatpush1.msra.mxu0 %v1252
  %1257 = vmatprep.subr.mxu0 %v1250
  %1258 = vmatpush1.msra.mxu0 %v1249
  %1259 = vmatprep.subr.mxu0 %v1247
  %1260 = vmatpush1.msra.mxu0 %v1246
  %1261 = vmatprep.subr.mxu0 %v1244
  %1262 = vmatpush1.msra.mxu0 %v1243
  %1263 = vmatprep.subr.mxu0 %v1241
  %1264 = vmatpush1.msra.mxu0 %v1240
  %1265 = vmatprep.subr.mxu0 %v1238
  %1266 = vmatpush1.msra.mxu0 %v1237
  %1267 = vmatprep.subr.mxu0 %v1235
  %1268 = vmatpush1.msra.mxu0 %v1234
  %1269 = vmatprep.subr.mxu0 %v1232
  %1270 = vmatpush1.msra.mxu0 %v1231
  %1271 = vmatprep.subr.mxu0 %v1229
  %1272 = vmatpush1.msra.mxu0 %v1228
  %1273 = vmatprep.subr.mxu0 %v1226
  %1274 = vmatpush1.msra.mxu0 %v1225
  %1275 = vmatprep.subr.mxu0 %v1223
  %1276 = vmatpush1.msra.mxu0 %v1222
  %1277 = vmatprep.subr.mxu0 %v1220
  %1278 = vmatpush1.msra.mxu0 %v1219
  %1279 = vmatprep.subr.mxu0 %v1217
  %1280 = vmatpush1.msra.mxu0 %v1216
  %1281 = vmatprep.subr.mxu0 %v1214
  %1282 = vmatpush1.msra.mxu0 %v1213
  %1283 = vmatprep.subr.mxu0 %v1211
  %1284 = vmatpush1.msra.mxu0 %v1210
  %1285 = vmatprep.subr.mxu0 %v1208
  %1286 = vmatpush1.msra.mxu0 %v1207
  %1287 = vmatprep.subr.mxu0 0.0
  %1288 = vmatpush2.msra.mxu0 0.0
  %1289 = vmatprep.subr.mxu0 0.0
  %1290 = vmatpush2.msra.mxu0 0.0
  %1291 = vmatprep.subr.mxu0 0.0
  %1292 = vmatpush2.msra.mxu0 0.0
  %1293 = vmatprep.subr.mxu0 0.0
  %1294 = vmatpush2.msra.mxu0 0.0
  %1295 = vmatprep.subr.mxu0 0.0
  %1296 = vmatpush2.msra.mxu0 0.0
  %1297 = vmatprep.subr.mxu0 0.0
  %1298 = vmatpush2.msra.mxu0 0.0
  %1299 = vmatprep.subr.mxu0 0.0
  %1300 = vmatpush2.msra.mxu0 0.0
  %1301 = vmatprep.subr.mxu0 0.0
  %1302 = vmatpush2.msra.mxu0 0.0
  %1303 = vmatprep.subr.mxu0 0.0
  %1304 = vmatpush2.msra.mxu0 0.0
  %1305 = vmatprep.subr.mxu0 0.0
  %1306 = vmatpush2.msra.mxu0 0.0
  %1307 = vmatprep.subr.mxu0 0.0
  %1308 = vmatpush2.msra.mxu0 0.0
  %1309 = vmatprep.subr.mxu0 0.0
  %1310 = vmatpush2.msra.mxu0 0.0
  %1311 = vmatprep.subr.mxu0 0.0
  %1312 = vmatpush2.msra.mxu0 0.0
  %1313 = vmatprep.subr.mxu0 0.0
  %1314 = vmatpush2.msra.mxu0 0.0
  %1315 = vmatprep.subr.mxu0 0.0
  %1316 = vmatpush2.msra.mxu0 0.0
  %1317 = vmatprep.subr.mxu0 0.0
  %1318 = vmatpush2.msra.mxu0 0.0
  %1319 = vmatprep.mubr.f32.mxu0 0.0
  %1320 = vmatmul.mubr.f32.gmra.mxu0 %v1200
  %v1321 = vpop.f32.mrf.mxu0
  %v1322 = vadd.f32 0.0, %v1321
  %v1323 = vpop.f32.mrf.mxu0
  %v1324 = vadd.f32 0.0, %v1323
  %1325 = vdwg.mxu0
  %1326 = vmatprep.subr.mxu0 0.0
  %1327 = vmatpush1.msra.mxu0 %v1254
  %1328 = vmatprep.subr.mxu0 0.0
  %1329 = vmatpush1.msra.mxu0 %v1251
  %1330 = vmatprep.subr.mxu0 0.0
  %1331 = vmatpush1.msra.mxu0 %v1248
  %1332 = vmatprep.subr.mxu0 0.0
  %1333 = vmatpush1.msra.mxu0 %v1245
  %1334 = vmatprep.subr.mxu0 0.0
  %1335 = vmatpush1.msra.mxu0 %v1242
  %1336 = vmatprep.subr.mxu0 0.0
  %1337 = vmatpush1.msra.mxu0 %v1239
  %1338 = vmatprep.subr.mxu0 0.0
  %1339 = vmatpush1.msra.mxu0 %v1236
  %1340 = vmatprep.subr.mxu0 0.0
  %1341 = vmatpush1.msra.mxu0 %v1233
  %1342 = vmatprep.subr.mxu0 0.0
  %1343 = vmatpush1.msra.mxu0 %v1230
  %1344 = vmatprep.subr.mxu0 0.0
  %1345 = vmatpush1.msra.mxu0 %v1227
  %1346 = vmatprep.subr.mxu0 0.0
  %1347 = vmatpush1.msra.mxu0 %v1224
  %1348 = vmatprep.subr.mxu0 0.0
  %1349 = vmatpush1.msra.mxu0 %v1221
  %1350 = vmatprep.subr.mxu0 0.0
  %1351 = vmatpush1.msra.mxu0 %v1218
  %1352 = vmatprep.subr.mxu0 0.0
  %1353 = vmatpush1.msra.mxu0 %v1215
  %1354 = vmatprep.subr.mxu0 0.0
  %1355 = vmatpush1.msra.mxu0 %v1212
  %1356 = vmatprep.subr.mxu0 0.0
  %1357 = vmatpush1.msra.mxu0 %v1209
  %1358 = vmatprep.subr.mxu0 0.0
  %1359 = vmatpush2.msra.mxu0 0.0
  %1360 = vmatprep.subr.mxu0 0.0
  %1361 = vmatpush2.msra.mxu0 0.0
  %1362 = vmatprep.subr.mxu0 0.0
  %1363 = vmatpush2.msra.mxu0 0.0
  %1364 = vmatprep.subr.mxu0 0.0
  %1365 = vmatpush2.msra.mxu0 0.0
  %1366 = vmatprep.subr.mxu0 0.0
  %1367 = vmatpush2.msra.mxu0 0.0
  %1368 = vmatprep.subr.mxu0 0.0
  %1369 = vmatpush2.msra.mxu0 0.0
  %1370 = vmatprep.subr.mxu0 0.0
  %1371 = vmatpush2.msra.mxu0 0.0
  %1372 = vmatprep.subr.mxu0 0.0
  %1373 = vmatpush2.msra.mxu0 0.0
  %1374 = vmatprep.subr.mxu0 0.0
  %1375 = vmatpush2.msra.mxu0 0.0
  %1376 = vmatprep.subr.mxu0 0.0
  %1377 = vmatpush2.msra.mxu0 0.0
  %1378 = vmatprep.subr.mxu0 0.0
  %1379 = vmatpush2.msra.mxu0 0.0
  %1380 = vmatprep.subr.mxu0 0.0
  %1381 = vmatpush2.msra.mxu0 0.0
  %1382 = vmatprep.subr.mxu0 0.0
  %1383 = vmatpush2.msra.mxu0 0.0
  %1384 = vmatprep.subr.mxu0 0.0
  %1385 = vmatpush2.msra.mxu0 0.0
  %1386 = vmatprep.subr.mxu0 0.0
  %1387 = vmatpush2.msra.mxu0 0.0
  %1388 = vmatprep.subr.mxu0 0.0
  %1389 = vmatpush2.msra.mxu0 0.0
  %1390 = vmatprep.mubr.f32.mxu0 0.0
  %1391 = vmatmul.mubr.f32.gmra.mxu0 %v1200
  %v1392 = vpop.f32.mrf.mxu0
  %v1393 = vadd.f32 0.0, %v1392
  %v1394 = vpop.f32.mrf.mxu0
  %1395 = vdwg.mxu0
  %v1396 = vadd.f32 %v1204, %v1322
  %v1397 = vxor.u32 %v1396, 2147483648
  %v1398 = vmul.f32 %v1397, 1.442695
  %v1399 = vpow.pop %v1398
  %v1400 = vadd.f32 %v1399, 1.0
  %v1401 = vrcp.pop %v1400
  %v1402 = vmul.f32 1.0, %v1401
  %v1403 = vadd.f32 %v1205, %v1324
  %v1404 = vxor.u32 %v1403, 2147483648
  %v1405 = vmul.f32 %v1404, 1.442695
  %v1406 = vpow.pop %v1405
  %v1407 = vadd.f32 %v1406, 1.0
  %v1408 = vrcp.pop %v1407
  %v1409 = vmul.f32 1.0, %v1408
  %v1410 = vadd.f32 %v1393, %v334
  %v1411 = vmul.f32 %v1402, %v1410
  %v1412 = vadd.f32 %v1206, %v1411
  %v1413 = vtanh.pop %v1412
  %v1414 = vsub.f32 1.0, %v1409
  %v1415 = vmul.f32 %v1414, %v1413
  %v1416 = vmul.f32 %v1409, %v1200
  %v1417 = vadd.f32 %v1415, %v1416
  %s1418 = scalar_lea.vmem %s5, 32
  %1419 = vst [vmem:[%s1418] sm:$0xff] %v1417
  %s1420 = scalar_lea.vmem [#allocation3], 120
  %v1421 = vld [vmem:[%s1420] sm:$0xff]
  %v1422 = vld [vmem:[%s1420 + $0x8] sm:$0xff]
  %v1423 = vld [vmem:[%s1420 + $0x10] sm:$0xff]
  %v1424 = vld [vmem:[%s2] sm:$0xff]
  %v1425 = vld [vmem:[%s2 + $0x8] sm:$0xff]
  %v1426 = vld [vmem:[%s2 + $0x10] sm:$0xff]
  %v1427 = vld [vmem:[%s2 + $0x18] sm:$0xff]
  %v1428 = vld [vmem:[%s2 + $0x20] sm:$0xff]
  %v1429 = vld [vmem:[%s2 + $0x28] sm:$0xff]
  %v1430 = vld [vmem:[%s2 + $0x30] sm:$0xff]
  %v1431 = vld [vmem:[%s2 + $0x38] sm:$0xff]
  %v1432 = vld [vmem:[%s2 + $0x40] sm:$0xff]
  %v1433 = vld [vmem:[%s2 + $0x48] sm:$0xff]
  %v1434 = vld [vmem:[%s2 + $0x50] sm:$0xff]
  %v1435 = vld [vmem:[%s2 + $0x58] sm:$0xff]
  %v1436 = vld [vmem:[%s2 + $0x60] sm:$0xff]
  %v1437 = vld [vmem:[%s2 + $0x68] sm:$0xff]
  %v1438 = vld [vmem:[%s2 + $0x70] sm:$0xff]
  %v1439 = vld [vmem:[%s2 + $0x78] sm:$0xff]
  %v1440 = vld [vmem:[%s2 + $0x80] sm:$0xff]
  %v1441 = vld [vmem:[%s2 + $0x88] sm:$0xff]
  %v1442 = vld [vmem:[%s2 + $0x90] sm:$0xff]
  %v1443 = vld [vmem:[%s2 + $0x98] sm:$0xff]
  %v1444 = vld [vmem:[%s2 + $0xa0] sm:$0xff]
  %v1445 = vld [vmem:[%s2 + $0xa8] sm:$0xff]
  %v1446 = vld [vmem:[%s2 + $0xb0] sm:$0xff]
  %v1447 = vld [vmem:[%s2 + $0xb8] sm:$0xff]
  %v1448 = vld [vmem:[%s2 + $0xc0] sm:$0xff]
  %v1449 = vld [vmem:[%s2 + $0xc8] sm:$0xff]
  %v1450 = vld [vmem:[%s2 + $0xd0] sm:$0xff]
  %v1451 = vld [vmem:[%s2 + $0xd8] sm:$0xff]
  %v1452 = vld [vmem:[%s2 + $0xe0] sm:$0xff]
  %v1453 = vld [vmem:[%s2 + $0xe8] sm:$0xff]
  %v1454 = vld [vmem:[%s2 + $0xf0] sm:$0xff]
  %v1455 = vld [vmem:[%s2 + $0xf8] sm:$0xff]
  %v1456 = vld [vmem:[%s2 + $0x100] sm:$0xff]
  %v1457 = vld [vmem:[%s2 + $0x108] sm:$0xff]
  %v1458 = vld [vmem:[%s2 + $0x110] sm:$0xff]
  %v1459 = vld [vmem:[%s2 + $0x118] sm:$0xff]
  %v1460 = vld [vmem:[%s2 + $0x120] sm:$0xff]
  %v1461 = vld [vmem:[%s2 + $0x128] sm:$0xff]
  %v1462 = vld [vmem:[%s2 + $0x130] sm:$0xff]
  %v1463 = vld [vmem:[%s2 + $0x138] sm:$0xff]
  %v1464 = vld [vmem:[%s2 + $0x140] sm:$0xff]
  %v1465 = vld [vmem:[%s2 + $0x148] sm:$0xff]
  %v1466 = vld [vmem:[%s2 + $0x150] sm:$0xff]
  %v1467 = vld [vmem:[%s2 + $0x158] sm:$0xff]
  %v1468 = vld [vmem:[%s2 + $0x160] sm:$0xff]
  %v1469 = vld [vmem:[%s2 + $0x168] sm:$0xff]
  %v1470 = vld [vmem:[%s2 + $0x170] sm:$0xff]
  %v1471 = vld [vmem:[%s2 + $0x178] sm:$0xff]
  %1472 = vmatprep.subr.mxu0 %v1470
  %1473 = vmatpush1.msra.mxu0 %v1469
  %1474 = vmatprep.subr.mxu0 %v1467
  %1475 = vmatpush1.msra.mxu0 %v1466
  %1476 = vmatprep.subr.mxu0 %v1464
  %1477 = vmatpush1.msra.mxu0 %v1463
  %1478 = vmatprep.subr.mxu0 %v1461
  %1479 = vmatpush1.msra.mxu0 %v1460
  %1480 = vmatprep.subr.mxu0 %v1458
  %1481 = vmatpush1.msra.mxu0 %v1457
  %1482 = vmatprep.subr.mxu0 %v1455
  %1483 = vmatpush1.msra.mxu0 %v1454
  %1484 = vmatprep.subr.mxu0 %v1452
  %1485 = vmatpush1.msra.mxu0 %v1451
  %1486 = vmatprep.subr.mxu0 %v1449
  %1487 = vmatpush1.msra.mxu0 %v1448
  %1488 = vmatprep.subr.mxu0 %v1446
  %1489 = vmatpush1.msra.mxu0 %v1445
  %1490 = vmatprep.subr.mxu0 %v1443
  %1491 = vmatpush1.msra.mxu0 %v1442
  %1492 = vmatprep.subr.mxu0 %v1440
  %1493 = vmatpush1.msra.mxu0 %v1439
  %1494 = vmatprep.subr.mxu0 %v1437
  %1495 = vmatpush1.msra.mxu0 %v1436
  %1496 = vmatprep.subr.mxu0 %v1434
  %1497 = vmatpush1.msra.mxu0 %v1433
  %1498 = vmatprep.subr.mxu0 %v1431
  %1499 = vmatpush1.msra.mxu0 %v1430
  %1500 = vmatprep.subr.mxu0 %v1428
  %1501 = vmatpush1.msra.mxu0 %v1427
  %1502 = vmatprep.subr.mxu0 %v1425
  %1503 = vmatpush1.msra.mxu0 %v1424
  %1504 = vmatprep.subr.mxu0 0.0
  %1505 = vmatpush2.msra.mxu0 0.0
  %1506 = vmatprep.subr.mxu0 0.0
  %1507 = vmatpush2.msra.mxu0 0.0
  %1508 = vmatprep.subr.mxu0 0.0
  %1509 = vmatpush2.msra.mxu0 0.0
  %1510 = vmatprep.subr.mxu0 0.0
  %1511 = vmatpush2.msra.mxu0 0.0
  %1512 = vmatprep.subr.mxu0 0.0
  %1513 = vmatpush2.msra.mxu0 0.0
  %1514 = vmatprep.subr.mxu0 0.0
  %1515 = vmatpush2.msra.mxu0 0.0
  %1516 = vmatprep.subr.mxu0 0.0
  %1517 = vmatpush2.msra.mxu0 0.0
  %1518 = vmatprep.subr.mxu0 0.0
  %1519 = vmatpush2.msra.mxu0 0.0
  %1520 = vmatprep.subr.mxu0 0.0
  %1521 = vmatpush2.msra.mxu0 0.0
  %1522 = vmatprep.subr.mxu0 0.0
  %1523 = vmatpush2.msra.mxu0 0.0
  %1524 = vmatprep.subr.mxu0 0.0
  %1525 = vmatpush2.msra.mxu0 0.0
  %1526 = vmatprep.subr.mxu0 0.0
  %1527 = vmatpush2.msra.mxu0 0.0
  %1528 = vmatprep.subr.mxu0 0.0
  %1529 = vmatpush2.msra.mxu0 0.0
  %1530 = vmatprep.subr.mxu0 0.0
  %1531 = vmatpush2.msra.mxu0 0.0
  %1532 = vmatprep.subr.mxu0 0.0
  %1533 = vmatpush2.msra.mxu0 0.0
  %1534 = vmatprep.subr.mxu0 0.0
  %1535 = vmatpush2.msra.mxu0 0.0
  %1536 = vmatprep.mubr.f32.mxu0 0.0
  %1537 = vmatmul.mubr.f32.gmra.mxu0 %v1417
  %v1538 = vpop.f32.mrf.mxu0
  %v1539 = vadd.f32 0.0, %v1538
  %v1540 = vpop.f32.mrf.mxu0
  %v1541 = vadd.f32 0.0, %v1540
  %1542 = vdwg.mxu0
  %1543 = vmatprep.subr.mxu0 0.0
  %1544 = vmatpush1.msra.mxu0 %v1471
  %1545 = vmatprep.subr.mxu0 0.0
  %1546 = vmatpush1.msra.mxu0 %v1468
  %1547 = vmatprep.subr.mxu0 0.0
  %1548 = vmatpush1.msra.mxu0 %v1465
  %1549 = vmatprep.subr.mxu0 0.0
  %1550 = vmatpush1.msra.mxu0 %v1462
  %1551 = vmatprep.subr.mxu0 0.0
  %1552 = vmatpush1.msra.mxu0 %v1459
  %1553 = vmatprep.subr.mxu0 0.0
  %1554 = vmatpush1.msra.mxu0 %v1456
  %1555 = vmatprep.subr.mxu0 0.0
  %1556 = vmatpush1.msra.mxu0 %v1453
  %1557 = vmatprep.subr.mxu0 0.0
  %1558 = vmatpush1.msra.mxu0 %v1450
  %1559 = vmatprep.subr.mxu0 0.0
  %1560 = vmatpush1.msra.mxu0 %v1447
  %1561 = vmatprep.subr.mxu0 0.0
  %1562 = vmatpush1.msra.mxu0 %v1444
  %1563 = vmatprep.subr.mxu0 0.0
  %1564 = vmatpush1.msra.mxu0 %v1441
  %1565 = vmatprep.subr.mxu0 0.0
  %1566 = vmatpush1.msra.mxu0 %v1438
  %1567 = vmatprep.subr.mxu0 0.0
  %1568 = vmatpush1.msra.mxu0 %v1435
  %1569 = vmatprep.subr.mxu0 0.0
  %1570 = vmatpush1.msra.mxu0 %v1432
  %1571 = vmatprep.subr.mxu0 0.0
  %1572 = vmatpush1.msra.mxu0 %v1429
  %1573 = vmatprep.subr.mxu0 0.0
  %1574 = vmatpush1.msra.mxu0 %v1426
  %1575 = vmatprep.subr.mxu0 0.0
  %1576 = vmatpush2.msra.mxu0 0.0
  %1577 = vmatprep.subr.mxu0 0.0
  %1578 = vmatpush2.msra.mxu0 0.0
  %1579 = vmatprep.subr.mxu0 0.0
  %1580 = vmatpush2.msra.mxu0 0.0
  %1581 = vmatprep.subr.mxu0 0.0
  %1582 = vmatpush2.msra.mxu0 0.0
  %1583 = vmatprep.subr.mxu0 0.0
  %1584 = vmatpush2.msra.mxu0 0.0
  %1585 = vmatprep.subr.mxu0 0.0
  %1586 = vmatpush2.msra.mxu0 0.0
  %1587 = vmatprep.subr.mxu0 0.0
  %1588 = vmatpush2.msra.mxu0 0.0
  %1589 = vmatprep.subr.mxu0 0.0
  %1590 = vmatpush2.msra.mxu0 0.0
  %1591 = vmatprep.subr.mxu0 0.0
  %1592 = vmatpush2.msra.mxu0 0.0
  %1593 = vmatprep.subr.mxu0 0.0
  %1594 = vmatpush2.msra.mxu0 0.0
  %1595 = vmatprep.subr.mxu0 0.0
  %1596 = vmatpush2.msra.mxu0 0.0
  %1597 = vmatprep.subr.mxu0 0.0
  %1598 = vmatpush2.msra.mxu0 0.0
  %1599 = vmatprep.subr.mxu0 0.0
  %1600 = vmatpush2.msra.mxu0 0.0
  %1601 = vmatprep.subr.mxu0 0.0
  %1602 = vmatpush2.msra.mxu0 0.0
  %1603 = vmatprep.subr.mxu0 0.0
  %1604 = vmatpush2.msra.mxu0 0.0
  %1605 = vmatprep.subr.mxu0 0.0
  %1606 = vmatpush2.msra.mxu0 0.0
  %1607 = vmatprep.mubr.f32.mxu0 0.0
  %1608 = vmatmul.mubr.f32.gmra.mxu0 %v1417
  %v1609 = vpop.f32.mrf.mxu0
  %v1610 = vadd.f32 0.0, %v1609
  %v1611 = vpop.f32.mrf.mxu0
  %1612 = vdwg.mxu0
  %v1613 = vadd.f32 %v1421, %v1539
  %v1614 = vxor.u32 %v1613, 2147483648
  %v1615 = vmul.f32 %v1614, 1.442695
  %v1616 = vpow.pop %v1615
  %v1617 = vadd.f32 %v1616, 1.0
  %v1618 = vrcp.pop %v1617
  %v1619 = vmul.f32 1.0, %v1618
  %v1620 = vadd.f32 %v1422, %v1541
  %v1621 = vxor.u32 %v1620, 2147483648
  %v1622 = vmul.f32 %v1621, 1.442695
  %v1623 = vpow.pop %v1622
  %v1624 = vadd.f32 %v1623, 1.0
  %v1625 = vrcp.pop %v1624
  %v1626 = vmul.f32 1.0, %v1625
  %v1627 = vadd.f32 %v1610, %v334
  %v1628 = vmul.f32 %v1619, %v1627
  %v1629 = vadd.f32 %v1423, %v1628
  %v1630 = vtanh.pop %v1629
  %v1631 = vsub.f32 1.0, %v1626
  %v1632 = vmul.f32 %v1631, %v1630
  %v1633 = vmul.f32 %v1626, %v1417
  %v1634 = vadd.f32 %v1632, %v1633
  %s1635 = scalar_lea.vmem %s5, 40
  %1636 = vst [vmem:[%s1635] sm:$0xff] %v1634
  %s1637 = scalar_lea.vmem [#allocation3], 144
  %v1638 = vld [vmem:[%s1637] sm:$0xff]
  %v1639 = vld [vmem:[%s1637 + $0x8] sm:$0xff]
  %v1640 = vld [vmem:[%s1637 + $0x10] sm:$0xff]
  %v1641 = vld [vmem:[%s2] sm:$0xff]
  %v1642 = vld [vmem:[%s2 + $0x8] sm:$0xff]
  %v1643 = vld [vmem:[%s2 + $0x10] sm:$0xff]
  %v1644 = vld [vmem:[%s2 + $0x18] sm:$0xff]
  %v1645 = vld [vmem:[%s2 + $0x20] sm:$0xff]
  %v1646 = vld [vmem:[%s2 + $0x28] sm:$0xff]
  %v1647 = vld [vmem:[%s2 + $0x30] sm:$0xff]
  %v1648 = vld [vmem:[%s2 + $0x38] sm:$0xff]
  %v1649 = vld [vmem:[%s2 + $0x40] sm:$0xff]
  %v1650 = vld [vmem:[%s2 + $0x48] sm:$0xff]
  %v1651 = vld [vmem:[%s2 + $0x50] sm:$0xff]
  %v1652 = vld [vmem:[%s2 + $0x58] sm:$0xff]
  %v1653 = vld [vmem:[%s2 + $0x60] sm:$0xff]
  %v1654 = vld [vmem:[%s2 + $0x68] sm:$0xff]
  %v1655 = vld [vmem:[%s2 + $0x70] sm:$0xff]
  %v1656 = vld [vmem:[%s2 + $0x78] sm:$0xff]
  %v1657 = vld [vmem:[%s2 + $0x80] sm:$0xff]
  %v1658 = vld [vmem:[%s2 + $0x88] sm:$0xff]
  %v1659 = vld [vmem:[%s2 + $0x90] sm:$0xff]
  %v1660 = vld [vmem:[%s2 + $0x98] sm:$0xff]
  %v1661 = vld [vmem:[%s2 + $0xa0] sm:$0xff]
  %v1662 = vld [vmem:[%s2 + $0xa8] sm:$0xff]
  %v1663 = vld [vmem:[%s2 + $0xb0] sm:$0xff]
  %v1664 = vld [vmem:[%s2 + $0xb8] sm:$0xff]
  %v1665 = vld [vmem:[%s2 + $0xc0] sm:$0xff]
  %v1666 = vld [vmem:[%s2 + $0xc8] sm:$0xff]
  %v1667 = vld [vmem:[%s2 + $0xd0] sm:$0xff]
  %v1668 = vld [vmem:[%s2 + $0xd8] sm:$0xff]
  %v1669 = vld [vmem:[%s2 + $0xe0] sm:$0xff]
  %v1670 = vld [vmem:[%s2 + $0xe8] sm:$0xff]
  %v1671 = vld [vmem:[%s2 + $0xf0] sm:$0xff]
  %v1672 = vld [vmem:[%s2 + $0xf8] sm:$0xff]
  %v1673 = vld [vmem:[%s2 + $0x100] sm:$0xff]
  %v1674 = vld [vmem:[%s2 + $0x108] sm:$0xff]
  %v1675 = vld [vmem:[%s2 + $0x110] sm:$0xff]
  %v1676 = vld [vmem:[%s2 + $0x118] sm:$0xff]
  %v1677 = vld [vmem:[%s2 + $0x120] sm:$0xff]
  %v1678 = vld [vmem:[%s2 + $0x128] sm:$0xff]
  %v1679 = vld [vmem:[%s2 + $0x130] sm:$0xff]
  %v1680 = vld [vmem:[%s2 + $0x138] sm:$0xff]
  %v1681 = vld [vmem:[%s2 + $0x140] sm:$0xff]
  %v1682 = vld [vmem:[%s2 + $0x148] sm:$0xff]
  %v1683 = vld [vmem:[%s2 + $0x150] sm:$0xff]
  %v1684 = vld [vmem:[%s2 + $0x158] sm:$0xff]
  %v1685 = vld [vmem:[%s2 + $0x160] sm:$0xff]
  %v1686 = vld [vmem:[%s2 + $0x168] sm:$0xff]
  %v1687 = vld [vmem:[%s2 + $0x170] sm:$0xff]
  %v1688 = vld [vmem:[%s2 + $0x178] sm:$0xff]
  %1689 = vmatprep.subr.mxu0 %v1687
  %1690 = vmatpush1.msra.mxu0 %v1686
  %1691 = vmatprep.subr.mxu0 %v1684
  %1692 = vmatpush1.msra.mxu0 %v1683
  %1693 = vmatprep.subr.mxu0 %v1681
  %1694 = vmatpush1.msra.mxu0 %v1680
  %1695 = vmatprep.subr.mxu0 %v1678
  %1696 = vmatpush1.msra.mxu0 %v1677
  %1697 = vmatprep.subr.mxu0 %v1675
  %1698 = vmatpush1.msra.mxu0 %v1674
  %1699 = vmatprep.subr.mxu0 %v1672
  %1700 = vmatpush1.msra.mxu0 %v1671
  %1701 = vmatprep.subr.mxu0 %v1669
  %1702 = vmatpush1.msra.mxu0 %v1668
  %1703 = vmatprep.subr.mxu0 %v1666
  %1704 = vmatpush1.msra.mxu0 %v1665
  %1705 = vmatprep.subr.mxu0 %v1663
  %1706 = vmatpush1.msra.mxu0 %v1662
  %1707 = vmatprep.subr.mxu0 %v1660
  %1708 = vmatpush1.msra.mxu0 %v1659
  %1709 = vmatprep.subr.mxu0 %v1657
  %1710 = vmatpush1.msra.mxu0 %v1656
  %1711 = vmatprep.subr.mxu0 %v1654
  %1712 = vmatpush1.msra.mxu0 %v1653
  %1713 = vmatprep.subr.mxu0 %v1651
  %1714 = vmatpush1.msra.mxu0 %v1650
  %1715 = vmatprep.subr.mxu0 %v1648
  %1716 = vmatpush1.msra.mxu0 %v1647
  %1717 = vmatprep.subr.mxu0 %v1645
  %1718 = vmatpush1.msra.mxu0 %v1644
  %1719 = vmatprep.subr.mxu0 %v1642
  %1720 = vmatpush1.msra.mxu0 %v1641
  %1721 = vmatprep.subr.mxu0 0.0
  %1722 = vmatpush2.msra.mxu0 0.0
  %1723 = vmatprep.subr.mxu0 0.0
  %1724 = vmatpush2.msra.mxu0 0.0
  %1725 = vmatprep.subr.mxu0 0.0
  %1726 = vmatpush2.msra.mxu0 0.0
  %1727 = vmatprep.subr.mxu0 0.0
  %1728 = vmatpush2.msra.mxu0 0.0
  %1729 = vmatprep.subr.mxu0 0.0
  %1730 = vmatpush2.msra.mxu0 0.0
  %1731 = vmatprep.subr.mxu0 0.0
  %1732 = vmatpush2.msra.mxu0 0.0
  %1733 = vmatprep.subr.mxu0 0.0
  %1734 = vmatpush2.msra.mxu0 0.0
  %1735 = vmatprep.subr.mxu0 0.0
  %1736 = vmatpush2.msra.mxu0 0.0
  %1737 = vmatprep.subr.mxu0 0.0
  %1738 = vmatpush2.msra.mxu0 0.0
  %1739 = vmatprep.subr.mxu0 0.0
  %1740 = vmatpush2.msra.mxu0 0.0
  %1741 = vmatprep.subr.mxu0 0.0
  %1742 = vmatpush2.msra.mxu0 0.0
  %1743 = vmatprep.subr.mxu0 0.0
  %1744 = vmatpush2.msra.mxu0 0.0
  %1745 = vmatprep.subr.mxu0 0.0
  %1746 = vmatpush2.msra.mxu0 0.0
  %1747 = vmatprep.subr.mxu0 0.0
  %1748 = vmatpush2.msra.mxu0 0.0
  %1749 = vmatprep.subr.mxu0 0.0
  %1750 = vmatpush2.msra.mxu0 0.0
  %1751 = vmatprep.subr.mxu0 0.0
  %1752 = vmatpush2.msra.mxu0 0.0
  %1753 = vmatprep.mubr.f32.mxu0 0.0
  %1754 = vmatmul.mubr.f32.gmra.mxu0 %v1634
  %v1755 = vpop.f32.mrf.mxu0
  %v1756 = vadd.f32 0.0, %v1755
  %v1757 = vpop.f32.mrf.mxu0
  %v1758 = vadd.f32 0.0, %v1757
  %1759 = vdwg.mxu0
  %1760 = vmatprep.subr.mxu0 0.0
  %1761 = vmatpush1.msra.mxu0 %v1688
  %1762 = vmatprep.subr.mxu0 0.0
  %1763 = vmatpush1.msra.mxu0 %v1685
  %1764 = vmatprep.subr.mxu0 0.0
  %1765 = vmatpush1.msra.mxu0 %v1682
  %1766 = vmatprep.subr.mxu0 0.0
  %1767 = vmatpush1.msra.mxu0 %v1679
  %1768 = vmatprep.subr.mxu0 0.0
  %1769 = vmatpush1.msra.mxu0 %v1676
  %1770 = vmatprep.subr.mxu0 0.0
  %1771 = vmatpush1.msra.mxu0 %v1673
  %1772 = vmatprep.subr.mxu0 0.0
  %1773 = vmatpush1.msra.mxu0 %v1670
  %1774 = vmatprep.subr.mxu0 0.0
  %1775 = vmatpush1.msra.mxu0 %v1667
  %1776 = vmatprep.subr.mxu0 0.0
  %1777 = vmatpush1.msra.mxu0 %v1664
  %1778 = vmatprep.subr.mxu0 0.0
  %1779 = vmatpush1.msra.mxu0 %v1661
  %1780 = vmatprep.subr.mxu0 0.0
  %1781 = vmatpush1.msra.mxu0 %v1658
  %1782 = vmatprep.subr.mxu0 0.0
  %1783 = vmatpush1.msra.mxu0 %v1655
  %1784 = vmatprep.subr.mxu0 0.0
  %1785 = vmatpush1.msra.mxu0 %v1652
  %1786 = vmatprep.subr.mxu0 0.0
  %1787 = vmatpush1.msra.mxu0 %v1649
  %1788 = vmatprep.subr.mxu0 0.0
  %1789 = vmatpush1.msra.mxu0 %v1646
  %1790 = vmatprep.subr.mxu0 0.0
  %1791 = vmatpush1.msra.mxu0 %v1643
  %1792 = vmatprep.subr.mxu0 0.0
  %1793 = vmatpush2.msra.mxu0 0.0
  %1794 = vmatprep.subr.mxu0 0.0
  %1795 = vmatpush2.msra.mxu0 0.0
  %1796 = vmatprep.subr.mxu0 0.0
  %1797 = vmatpush2.msra.mxu0 0.0
  %1798 = vmatprep.subr.mxu0 0.0
  %1799 = vmatpush2.msra.mxu0 0.0
  %1800 = vmatprep.subr.mxu0 0.0
  %1801 = vmatpush2.msra.mxu0 0.0
  %1802 = vmatprep.subr.mxu0 0.0
  %1803 = vmatpush2.msra.mxu0 0.0
  %1804 = vmatprep.subr.mxu0 0.0
  %1805 = vmatpush2.msra.mxu0 0.0
  %1806 = vmatprep.subr.mxu0 0.0
  %1807 = vmatpush2.msra.mxu0 0.0
  %1808 = vmatprep.subr.mxu0 0.0
  %1809 = vmatpush2.msra.mxu0 0.0
  %1810 = vmatprep.subr.mxu0 0.0
  %1811 = vmatpush2.msra.mxu0 0.0
  %1812 = vmatprep.subr.mxu0 0.0
  %1813 = vmatpush2.msra.mxu0 0.0
  %1814 = vmatprep.subr.mxu0 0.0
  %1815 = vmatpush2.msra.mxu0 0.0
  %1816 = vmatprep.subr.mxu0 0.0
  %1817 = vmatpush2.msra.mxu0 0.0
  %1818 = vmatprep.subr.mxu0 0.0
  %1819 = vmatpush2.msra.mxu0 0.0
  %1820 = vmatprep.subr.mxu0 0.0
  %1821 = vmatpush2.msra.mxu0 0.0
  %1822 = vmatprep.subr.mxu0 0.0
  %1823 = vmatpush2.msra.mxu0 0.0
  %1824 = vmatprep.mubr.f32.mxu0 0.0
  %1825 = vmatmul.mubr.f32.gmra.mxu0 %v1634
  %v1826 = vpop.f32.mrf.mxu0
  %v1827 = vadd.f32 0.0, %v1826
  %v1828 = vpop.f32.mrf.mxu0
  %1829 = vdwg.mxu0
  %v1830 = vadd.f32 %v1638, %v1756
  %v1831 = vxor.u32 %v1830, 2147483648
  %v1832 = vmul.f32 %v1831, 1.442695
  %v1833 = vpow.pop %v1832
  %v1834 = vadd.f32 %v1833, 1.0
  %v1835 = vrcp.pop %v1834
  %v1836 = vmul.f32 1.0, %v1835
  %v1837 = vadd.f32 %v1639, %v1758
  %v1838 = vxor.u32 %v1837, 2147483648
  %v1839 = vmul.f32 %v1838, 1.442695
  %v1840 = vpow.pop %v1839
  %v1841 = vadd.f32 %v1840, 1.0
  %v1842 = vrcp.pop %v1841
  %v1843 = vmul.f32 1.0, %v1842
  %v1844 = vadd.f32 %v1827, %v334
  %v1845 = vmul.f32 %v1836, %v1844
  %v1846 = vadd.f32 %v1640, %v1845
  %v1847 = vtanh.pop %v1846
  %v1848 = vsub.f32 1.0, %v1843
  %v1849 = vmul.f32 %v1848, %v1847
  %v1850 = vmul.f32 %v1843, %v1634
  %v1851 = vadd.f32 %v1849, %v1850
  %s1852 = scalar_lea.vmem %s5, 48
  %1853 = vst [vmem:[%s1852] sm:$0xff] %v1851
  %s1854 = scalar_lea.vmem [#allocation3], 168
  %v1855 = vld [vmem:[%s1854] sm:$0xff]
  %v1856 = vld [vmem:[%s1854 + $0x8] sm:$0xff]
  %v1857 = vld [vmem:[%s1854 + $0x10] sm:$0xff]
  %v1858 = vld [vmem:[%s2] sm:$0xff]
  %v1859 = vld [vmem:[%s2 + $0x8] sm:$0xff]
  %v1860 = vld [vmem:[%s2 + $0x10] sm:$0xff]
  %v1861 = vld [vmem:[%s2 + $0x18] sm:$0xff]
  %v1862 = vld [vmem:[%s2 + $0x20] sm:$0xff]
  %v1863 = vld [vmem:[%s2 + $0x28] sm:$0xff]
  %v1864 = vld [vmem:[%s2 + $0x30] sm:$0xff]
  %v1865 = vld [vmem:[%s2 + $0x38] sm:$0xff]
  %v1866 = vld [vmem:[%s2 + $0x40] sm:$0xff]
  %v1867 = vld [vmem:[%s2 + $0x48] sm:$0xff]
  %v1868 = vld [vmem:[%s2 + $0x50] sm:$0xff]
  %v1869 = vld [vmem:[%s2 + $0x58] sm:$0xff]
  %v1870 = vld [vmem:[%s2 + $0x60] sm:$0xff]
  %v1871 = vld [vmem:[%s2 + $0x68] sm:$0xff]
  %v1872 = vld [vmem:[%s2 + $0x70] sm:$0xff]
  %v1873 = vld [vmem:[%s2 + $0x78] sm:$0xff]
  %v1874 = vld [vmem:[%s2 + $0x80] sm:$0xff]
  %v1875 = vld [vmem:[%s2 + $0x88] sm:$0xff]
  %v1876 = vld [vmem:[%s2 + $0x90] sm:$0xff]
  %v1877 = vld [vmem:[%s2 + $0x98] sm:$0xff]
  %v1878 = vld [vmem:[%s2 + $0xa0] sm:$0xff]
  %v1879 = vld [vmem:[%s2 + $0xa8] sm:$0xff]
  %v1880 = vld [vmem:[%s2 + $0xb0] sm:$0xff]
  %v1881 = vld [vmem:[%s2 + $0xb8] sm:$0xff]
  %v1882 = vld [vmem:[%s2 + $0xc0] sm:$0xff]
  %v1883 = vld [vmem:[%s2 + $0xc8] sm:$0xff]
  %v1884 = vld [vmem:[%s2 + $0xd0] sm:$0xff]
  %v1885 = vld [vmem:[%s2 + $0xd8] sm:$0xff]
  %v1886 = vld [vmem:[%s2 + $0xe0] sm:$0xff]
  %v1887 = vld [vmem:[%s2 + $0xe8] sm:$0xff]
  %v1888 = vld [vmem:[%s2 + $0xf0] sm:$0xff]
  %v1889 = vld [vmem:[%s2 + $0xf8] sm:$0xff]
  %v1890 = vld [vmem:[%s2 + $0x100] sm:$0xff]
  %v1891 = vld [vmem:[%s2 + $0x108] sm:$0xff]
  %v1892 = vld [vmem:[%s2 + $0x110] sm:$0xff]
  %v1893 = vld [vmem:[%s2 + $0x118] sm:$0xff]
  %v1894 = vld [vmem:[%s2 + $0x120] sm:$0xff]
  %v1895 = vld [vmem:[%s2 + $0x128] sm:$0xff]
  %v1896 = vld [vmem:[%s2 + $0x130] sm:$0xff]
  %v1897 = vld [vmem:[%s2 + $0x138] sm:$0xff]
  %v1898 = vld [vmem:[%s2 + $0x140] sm:$0xff]
  %v1899 = vld [vmem:[%s2 + $0x148] sm:$0xff]
  %v1900 = vld [vmem:[%s2 + $0x150] sm:$0xff]
  %v1901 = vld [vmem:[%s2 + $0x158] sm:$0xff]
  %v1902 = vld [vmem:[%s2 + $0x160] sm:$0xff]
  %v1903 = vld [vmem:[%s2 + $0x168] sm:$0xff]
  %v1904 = vld [vmem:[%s2 + $0x170] sm:$0xff]
  %v1905 = vld [vmem:[%s2 + $0x178] sm:$0xff]
  %1906 = vmatprep.subr.mxu0 %v1904
  %1907 = vmatpush1.msra.mxu0 %v1903
  %1908 = vmatprep.subr.mxu0 %v1901
  %1909 = vmatpush1.msra.mxu0 %v1900
  %1910 = vmatprep.subr.mxu0 %v1898
  %1911 = vmatpush1.msra.mxu0 %v1897
  %1912 = vmatprep.subr.mxu0 %v1895
  %1913 = vmatpush1.msra.mxu0 %v1894
  %1914 = vmatprep.subr.mxu0 %v1892
  %1915 = vmatpush1.msra.mxu0 %v1891
  %1916 = vmatprep.subr.mxu0 %v1889
  %1917 = vmatpush1.msra.mxu0 %v1888
  %1918 = vmatprep.subr.mxu0 %v1886
  %1919 = vmatpush1.msra.mxu0 %v1885
  %1920 = vmatprep.subr.mxu0 %v1883
  %1921 = vmatpush1.msra.mxu0 %v1882
  %1922 = vmatprep.subr.mxu0 %v1880
  %1923 = vmatpush1.msra.mxu0 %v1879
  %1924 = vmatprep.subr.mxu0 %v1877
  %1925 = vmatpush1.msra.mxu0 %v1876
  %1926 = vmatprep.subr.mxu0 %v1874
  %1927 = vmatpush1.msra.mxu0 %v1873
  %1928 = vmatprep.subr.mxu0 %v1871
  %1929 = vmatpush1.msra.mxu0 %v1870
  %1930 = vmatprep.subr.mxu0 %v1868
  %1931 = vmatpush1.msra.mxu0 %v1867
  %1932 = vmatprep.subr.mxu0 %v1865
  %1933 = vmatpush1.msra.mxu0 %v1864
  %1934 = vmatprep.subr.mxu0 %v1862
  %1935 = vmatpush1.msra.mxu0 %v1861
  %1936 = vmatprep.subr.mxu0 %v1859
  %1937 = vmatpush1.msra.mxu0 %v1858
  %1938 = vmatprep.subr.mxu0 0.0
  %1939 = vmatpush2.msra.mxu0 0.0
  %1940 = vmatprep.subr.mxu0 0.0
  %1941 = vmatpush2.msra.mxu0 0.0
  %1942 = vmatprep.subr.mxu0 0.0
  %1943 = vmatpush2.msra.mxu0 0.0
  %1944 = vmatprep.subr.mxu0 0.0
  %1945 = vmatpush2.msra.mxu0 0.0
  %1946 = vmatprep.subr.mxu0 0.0
  %1947 = vmatpush2.msra.mxu0 0.0
  %1948 = vmatprep.subr.mxu0 0.0
  %1949 = vmatpush2.msra.mxu0 0.0
  %1950 = vmatprep.subr.mxu0 0.0
  %1951 = vmatpush2.msra.mxu0 0.0
  %1952 = vmatprep.subr.mxu0 0.0
  %1953 = vmatpush2.msra.mxu0 0.0
  %1954 = vmatprep.subr.mxu0 0.0
  %1955 = vmatpush2.msra.mxu0 0.0
  %1956 = vmatprep.subr.mxu0 0.0
  %1957 = vmatpush2.msra.mxu0 0.0
  %1958 = vmatprep.subr.mxu0 0.0
  %1959 = vmatpush2.msra.mxu0 0.0
  %1960 = vmatprep.subr.mxu0 0.0
  %1961 = vmatpush2.msra.mxu0 0.0
  %1962 = vmatprep.subr.mxu0 0.0
  %1963 = vmatpush2.msra.mxu0 0.0
  %1964 = vmatprep.subr.mxu0 0.0
  %1965 = vmatpush2.msra.mxu0 0.0
  %1966 = vmatprep.subr.mxu0 0.0
  %1967 = vmatpush2.msra.mxu0 0.0
  %1968 = vmatprep.subr.mxu0 0.0
  %1969 = vmatpush2.msra.mxu0 0.0
  %1970 = vmatprep.mubr.f32.mxu0 0.0
  %1971 = vmatmul.mubr.f32.gmra.mxu0 %v1851
  %v1972 = vpop.f32.mrf.mxu0
  %v1973 = vadd.f32 0.0, %v1972
  %v1974 = vpop.f32.mrf.mxu0
  %v1975 = vadd.f32 0.0, %v1974
  %1976 = vdwg.mxu0
  %1977 = vmatprep.subr.mxu0 0.0
  %1978 = vmatpush1.msra.mxu0 %v1905
  %1979 = vmatprep.subr.mxu0 0.0
  %1980 = vmatpush1.msra.mxu0 %v1902
  %1981 = vmatprep.subr.mxu0 0.0
  %1982 = vmatpush1.msra.mxu0 %v1899
  %1983 = vmatprep.subr.mxu0 0.0
  %1984 = vmatpush1.msra.mxu0 %v1896
  %1985 = vmatprep.subr.mxu0 0.0
  %1986 = vmatpush1.msra.mxu0 %v1893
  %1987 = vmatprep.subr.mxu0 0.0
  %1988 = vmatpush1.msra.mxu0 %v1890
  %1989 = vmatprep.subr.mxu0 0.0
  %1990 = vmatpush1.msra.mxu0 %v1887
  %1991 = vmatprep.subr.mxu0 0.0
  %1992 = vmatpush1.msra.mxu0 %v1884
  %1993 = vmatprep.subr.mxu0 0.0
  %1994 = vmatpush1.msra.mxu0 %v1881
  %1995 = vmatprep.subr.mxu0 0.0
  %1996 = vmatpush1.msra.mxu0 %v1878
  %1997 = vmatprep.subr.mxu0 0.0
  %1998 = vmatpush1.msra.mxu0 %v1875
  %1999 = vmatprep.subr.mxu0 0.0
  %2000 = vmatpush1.msra.mxu0 %v1872
  %2001 = vmatprep.subr.mxu0 0.0
  %2002 = vmatpush1.msra.mxu0 %v1869
  %2003 = vmatprep.subr.mxu0 0.0
  %2004 = vmatpush1.msra.mxu0 %v1866
  %2005 = vmatprep.subr.mxu0 0.0
  %2006 = vmatpush1.msra.mxu0 %v1863
  %2007 = vmatprep.subr.mxu0 0.0
  %2008 = vmatpush1.msra.mxu0 %v1860
  %2009 = vmatprep.subr.mxu0 0.0
  %2010 = vmatpush2.msra.mxu0 0.0
  %2011 = vmatprep.subr.mxu0 0.0
  %2012 = vmatpush2.msra.mxu0 0.0
  %2013 = vmatprep.subr.mxu0 0.0
  %2014 = vmatpush2.msra.mxu0 0.0
  %2015 = vmatprep.subr.mxu0 0.0
  %2016 = vmatpush2.msra.mxu0 0.0
  %2017 = vmatprep.subr.mxu0 0.0
  %2018 = vmatpush2.msra.mxu0 0.0
  %2019 = vmatprep.subr.mxu0 0.0
  %2020 = vmatpush2.msra.mxu0 0.0
  %2021 = vmatprep.subr.mxu0 0.0
  %2022 = vmatpush2.msra.mxu0 0.0
  %2023 = vmatprep.subr.mxu0 0.0
  %2024 = vmatpush2.msra.mxu0 0.0
  %2025 = vmatprep.subr.mxu0 0.0
  %2026 = vmatpush2.msra.mxu0 0.0
  %2027 = vmatprep.subr.mxu0 0.0
  %2028 = vmatpush2.msra.mxu0 0.0
  %2029 = vmatprep.subr.mxu0 0.0
  %2030 = vmatpush2.msra.mxu0 0.0
  %2031 = vmatprep.subr.mxu0 0.0
  %2032 = vmatpush2.msra.mxu0 0.0
  %2033 = vmatprep.subr.mxu0 0.0
  %2034 = vmatpush2.msra.mxu0 0.0
  %2035 = vmatprep.subr.mxu0 0.0
  %2036 = vmatpush2.msra.mxu0 0.0
  %2037 = vmatprep.subr.mxu0 0.0
  %2038 = vmatpush2.msra.mxu0 0.0
  %2039 = vmatprep.subr.mxu0 0.0
  %2040 = vmatpush2.msra.mxu0 0.0
  %2041 = vmatprep.mubr.f32.mxu0 0.0
  %2042 = vmatmul.mubr.f32.gmra.mxu0 %v1851
  %v2043 = vpop.f32.mrf.mxu0
  %v2044 = vadd.f32 0.0, %v2043
  %v2045 = vpop.f32.mrf.mxu0
  %2046 = vdwg.mxu0
  %v2047 = vadd.f32 %v1855, %v1973
  %v2048 = vxor.u32 %v2047, 2147483648
  %v2049 = vmul.f32 %v2048, 1.442695
  %v2050 = vpow.pop %v2049
  %v2051 = vadd.f32 %v2050, 1.0
  %v2052 = vrcp.pop %v2051
  %v2053 = vmul.f32 1.0, %v2052
  %v2054 = vadd.f32 %v1856, %v1975
  %v2055 = vxor.u32 %v2054, 2147483648
  %v2056 = vmul.f32 %v2055, 1.442695
  %v2057 = vpow.pop %v2056
  %v2058 = vadd.f32 %v2057, 1.0
  %v2059 = vrcp.pop %v2058
  %v2060 = vmul.f32 1.0, %v2059
  %v2061 = vadd.f32 %v2044, %v334
  %v2062 = vmul.f32 %v2053, %v2061
  %v2063 = vadd.f32 %v1857, %v2062
  %v2064 = vtanh.pop %v2063
  %v2065 = vsub.f32 1.0, %v2060
  %v2066 = vmul.f32 %v2065, %v2064
  %v2067 = vmul.f32 %v2060, %v1851
  %v2068 = vadd.f32 %v2066, %v2067
  %s2069 = scalar_lea.vmem %s5, 56
  %2070 = vst [vmem:[%s2069] sm:$0xff] %v2068
  %2071 = vst [vmem:[#allocation2] sm:$0xff] %v2068
  // Predicated region
  $region26: #{gru_forward.1} parent=0 // pred_check
    _
  $region27: #{gru_forward.1} parent=0 // pred_check_branch
    %2073 = sbr.rel (0) target = $region29
  $region28: #{gru_forward.1} parent=0 // pred_region
    _
  $region29: #{gru_forward.1} parent=0 // pred_fallthru
    _
  // Predicated region
  $region30: #{gru_forward.1} parent=0 // pred_check
    _
  $region31: #{gru_forward.1} parent=0 // pred_check_branch
    %2075 = sbr.rel (0) target = $region33
  $region32: #{gru_forward.1} parent=0 // pred_region
    _
  $region33: #{gru_forward.1} parent=0 // pred_fallthru
    _

</llo_original>
